<compile_context>
chip_gen: v7x
topology: tpu7x:2x2x1
jax: 0.10.0
libtpu: 0.0.40
codegen_flags: <defaults>
</compile_context>

<pallas_src>
import math

import jax
import jax.numpy as jnp
import numpy as np
from jax.experimental import pallas as pl
from jax.experimental.pallas import tpu as pltpu


# --------------------------------------------------------------------------------------
# Fused Pallas kernel for the whole residual attention block
# --------------------------------------------------------------------------------------

def _make_block_kernel(L, D, H, eps=1e-5):
    Dh = D // H
    scale = 1.0 / math.sqrt(Dh)

    def layer_norm(v, g, b):
        mu = jnp.mean(v, axis=-1, keepdims=True)
        d = v - mu
        var = jnp.mean(d * d, axis=-1, keepdims=True)
        return d * jax.lax.rsqrt(var + eps) * g + b

    def kernel(x_ref, mask_ref, g1_ref, b1_ref, wqkv_ref, bqkv_ref, wo_ref, bo_ref,
               g2_ref, b2_ref, wfc_ref, bfc_ref, wpj_ref, bpj_ref, o_ref):
        x = x_ref[0]                                    # (L, D) f32, VMEM-resident
        mask = mask_ref[...]                            # (L, L) additive attention mask

        # ---- x = x + attention(ln_1(x)) --------------------------------------------
        xln = layer_norm(x, g1_ref[...], b1_ref[...])
        # Fused QKV projection: one lane/contraction-dense MXU matmul (L,D) @ (D,3D).
        qkv = jnp.dot(xln, wqkv_ref[...], preferred_element_type=jnp.float32) + bqkv_ref[...]

        heads = []
        for h in range(H):                              # statically unrolled heads
            lo = h * Dh
            qh = qkv[:, lo:lo + Dh] * scale             # (L, Dh)
            kh = qkv[:, D + lo:D + lo + Dh]             # (L, Dh)
            vh = qkv[:, 2 * D + lo:2 * D + lo + Dh]     # (L, Dh)
            s = jnp.dot(qh, kh.T, preferred_element_type=jnp.float32) + mask   # (L, L)
            s = s - jnp.max(s, axis=-1, keepdims=True)  # stable softmax
            e = jnp.exp(s)
            p = e * (1.0 / jnp.sum(e, axis=-1, keepdims=True))
            heads.append(jnp.dot(p, vh, preferred_element_type=jnp.float32))
        ctx = jnp.concatenate(heads, axis=-1)           # (L, D)
        attn_out = jnp.dot(ctx, wo_ref[...], preferred_element_type=jnp.float32) + bo_ref[...]
        x1 = x + attn_out

        # ---- x = x + mlp(ln_2(x)) ----------------------------------------------------
        x2 = layer_norm(x1, g2_ref[...], b2_ref[...])
        hmid = jnp.dot(x2, wfc_ref[...], preferred_element_type=jnp.float32) + bfc_ref[...]
        hmid = hmid * (1.0 / (1.0 + jnp.exp(-1.702 * hmid)))      # QuickGELU
        y = jnp.dot(hmid, wpj_ref[...], preferred_element_type=jnp.float32) + bpj_ref[...]
        o_ref[0] = x1 + y

    return kernel


def residual_attention_block(x, params, attn_mask=None):
    """Forward of ResidualAttentionBlock.

    x:         (L, N, D) = (seq, batch, d_model) — PyTorch nn.MultiheadAttention layout.
    params:    dict with ln_1/ln_2 affine, fused in_proj (QKV), out_proj, mlp weights.
               Linear weights are stored already transposed: (in, out).
    attn_mask: optional (L, L) additive float mask (CLIP-style causal mask).
    """
    # TODO(synk): boolean / key-padding attn_mask variants not implemented; only the
    #             additive float mask used by CLIP's build_attention_mask is supported.
    L, N, D = x.shape
    H = params["n_head"]
    assert D % H == 0
    orig_dtype = x.dtype

    xf = jnp.transpose(x, (1, 0, 2)).astype(jnp.float32)            # (N, L, D) batch-major
    mask = (jnp.zeros((L, L), jnp.float32) if attn_mask is None
            else attn_mask.astype(jnp.float32))

    kernel = _make_block_kernel(L, D, H)

    def rep(shape):      # replicated operand: same (full) block for every grid step
        return pl.BlockSpec(shape, lambda n, _s=shape: (0,) * len(_s))

    out = pl.pallas_call(
        kernel,
        out_shape=jax.ShapeDtypeStruct((N, L, D), jnp.float32),
        grid=(N,),
        in_specs=[
            pl.BlockSpec((1, L, D), lambda n: (n, 0, 0)),            # x: one sequence / step
            rep((L, L)),                                             # attn_mask
            rep((1, D)), rep((1, D)),                                # ln_1 gamma / beta
            rep((D, 3 * D)), rep((1, 3 * D)),                        # fused in_proj (QKV)
            rep((D, D)), rep((1, D)),                                # out_proj
            rep((1, D)), rep((1, D)),                                # ln_2 gamma / beta
            rep((D, 4 * D)), rep((1, 4 * D)),                        # mlp.c_fc
            rep((4 * D, D)), rep((1, D)),                            # mlp.c_proj
        ],
        out_specs=pl.BlockSpec((1, L, D), lambda n: (n, 0, 0)),
        compiler_params=pltpu.CompilerParams(
            dimension_semantics=("parallel",),                       # v7x: shard batch over 2 TCs
            vmem_limit_bytes=32 * 1024 * 1024,                       # explicit, safe on v5e/v6e/v7x
        ),
    )(
        xf, mask,
        params["ln1_g"].reshape(1, D), params["ln1_b"].reshape(1, D),
        params["w_qkv"], params["b_qkv"].reshape(1, 3 * D),
        params["w_out"], params["b_out"].reshape(1, D),
        params["ln2_g"].reshape(1, D), params["ln2_b"].reshape(1, D),
        params["w_fc"], params["b_fc"].reshape(1, 4 * D),
        params["w_proj"], params["b_proj"].reshape(1, D),
    )
    return jnp.transpose(out, (1, 0, 2)).astype(orig_dtype)


# --------------------------------------------------------------------------------------
# Pure-JAX reference (mirrors the PyTorch module) + deterministic parameter init
# --------------------------------------------------------------------------------------

def residual_attention_block_ref(x, params, attn_mask=None):
    L, N, D = x.shape
    H = params["n_head"]
    Dh = D // H
    x = x.astype(jnp.float32)

    def ln(v, g, b, eps=1e-5):
        mu = v.mean(-1, keepdims=True)
        var = ((v - mu) ** 2).mean(-1, keepdims=True)
        return (v - mu) / jnp.sqrt(var + eps) * g + b

    mask = jnp.zeros((L, L), jnp.float32) if attn_mask is None else attn_mask.astype(jnp.float32)

    xln = ln(x, params["ln1_g"], params["ln1_b"])
    qkv = xln @ params["w_qkv"] + params["b_qkv"]                    # (L, N, 3D)
    q, k, v = qkv[..., :D], qkv[..., D:2 * D], qkv[..., 2 * D:]

    def split(t):                                                    # (L, N, D) -> (N, H, L, Dh)
        return jnp.transpose(t.reshape(L, N, H, Dh), (1, 2, 0, 3))

    qh, kh, vh = split(q), split(k), split(v)
    s = jnp.einsum("nhqd,nhkd->nhqk", qh, kh) / math.sqrt(Dh) + mask[None, None]
    p = jax.nn.softmax(s, axis=-1)
    ctx = jnp.einsum("nhqk,nhkd->nhqd", p, vh)
    ctx = jnp.transpose(ctx, (2, 0, 1, 3)).reshape(L, N, D)
    x = x + ctx @ params["w_out"] + params["b_out"]

    x2 = ln(x, params["ln2_g"], params["ln2_b"])
    h = x2 @ params["w_fc"] + params["b_fc"]
    h = h * jax.nn.sigmoid(1.702 * h)                                # QuickGELU
    return x + h @ params["w_proj"] + params["b_proj"]


def init_params(key, d_model, n_head):
    D = d_model
    ks = jax.random.split(key, 12)

    def w(k, shape, s=0.02):
        return s * jax.random.normal(k, shape, jnp.float32)

    return {
        "n_head": n_head,
        "ln1_g": 1.0 + 0.1 * jax.random.normal(ks[0], (D,), jnp.float32),
        "ln1_b": 0.1 * jax.random.normal(ks[1], (D,), jnp.float32),
        "w_qkv": w(ks[2], (D, 3 * D)),        # = in_proj_weight.T
        "b_qkv": w(ks[3], (3 * D,)),
        "w_out": w(ks[4], (D, D)),            # = out_proj.weight.T
        "b_out": w(ks[5], (D,)),
        "ln2_g": 1.0 + 0.1 * jax.random.normal(ks[6], (D,), jnp.float32),
        "ln2_b": 0.1 * jax.random.normal(ks[7], (D,), jnp.float32),
        "w_fc": w(ks[8], (D, 4 * D)),         # = mlp.c_fc.weight.T
        "b_fc": w(ks[9], (4 * D,)),
        "w_proj": w(ks[10], (4 * D, D)),      # = mlp.c_proj.weight.T
        "b_proj": w(ks[11], (D,)),
    }


# --------------------------------------------------------------------------------------
if __name__ == "__main__":
    # Small shapes consistent with the module: (seq, batch, d_model) with n_head heads.
    L, N, D, H = 16, 2, 128, 4

    key = jax.random.PRNGKey(0)
    kp, kx = jax.random.split(key)
    params = init_params(kp, D, H)
    x = jax.random.normal(kx, (L, N, D), jnp.float32)

    # CLIP-style causal additive attention mask (upper triangle masked out).
    attn_mask = jnp.triu(jnp.full((L, L), -1e9, jnp.float32), k=1)

    out = residual_attention_block(x, params, attn_mask=attn_mask)
    jax.block_until_ready(out)

    ref = residual_attention_block_ref(x, params, attn_mask=attn_mask)
    np.testing.assert_allclose(np.asarray(out), np.asarray(ref), rtol=2e-3, atol=2e-3)
    print("KERNEL_OK")
</pallas_src>

<mosaic_0001>
module attributes {stable_mosaic.version = 11 : i64} {
  func.func @kernel(%arg0: i32, %arg1: memref<1x16x128xf32, #tpu.memory_space<vmem>>, %arg2: memref<16x16xf32, #tpu.memory_space<vmem>>, %arg3: memref<1x128xf32, #tpu.memory_space<vmem>>, %arg4: memref<1x128xf32, #tpu.memory_space<vmem>>, %arg5: memref<128x384xf32, #tpu.memory_space<vmem>>, %arg6: memref<1x384xf32, #tpu.memory_space<vmem>>, %arg7: memref<128x128xf32, #tpu.memory_space<vmem>>, %arg8: memref<1x128xf32, #tpu.memory_space<vmem>>, %arg9: memref<1x128xf32, #tpu.memory_space<vmem>>, %arg10: memref<1x128xf32, #tpu.memory_space<vmem>>, %arg11: memref<128x512xf32, #tpu.memory_space<vmem>>, %arg12: memref<1x512xf32, #tpu.memory_space<vmem>>, %arg13: memref<512x128xf32, #tpu.memory_space<vmem>>, %arg14: memref<1x128xf32, #tpu.memory_space<vmem>>, %arg15: memref<1x16x128xf32, #tpu.memory_space<vmem>>) attributes {dimension_semantics = [#tpu.dimension_semantics<parallel>], iteration_bounds = array<i64: 2>, scalar_prefetch = 0 : i64, scratch_operands = 0 : i64, tpu.core_type = #tpu.core_type<tc>, window_params = [{transform_indices = @transform_0, window_bounds = array<i64: 1, 16, 128>}, {pipeline_mode = #tpu.pipeline_mode<synchronous>, transform_indices = @transform_1, window_bounds = array<i64: 16, 16>}, {pipeline_mode = #tpu.pipeline_mode<synchronous>, transform_indices = @transform_2, window_bounds = array<i64: 1, 128>}, {pipeline_mode = #tpu.pipeline_mode<synchronous>, transform_indices = @transform_3, window_bounds = array<i64: 1, 128>}, {pipeline_mode = #tpu.pipeline_mode<synchronous>, transform_indices = @transform_4, window_bounds = array<i64: 128, 384>}, {pipeline_mode = #tpu.pipeline_mode<synchronous>, transform_indices = @transform_5, window_bounds = array<i64: 1, 384>}, {pipeline_mode = #tpu.pipeline_mode<synchronous>, transform_indices = @transform_6, window_bounds = array<i64: 128, 128>}, {pipeline_mode = #tpu.pipeline_mode<synchronous>, transform_indices = @transform_7, window_bounds = array<i64: 1, 128>}, {pipeline_mode = #tpu.pipeline_mode<synchronous>, transform_indices = @transform_8, window_bounds = array<i64: 1, 128>}, {pipeline_mode = #tpu.pipeline_mode<synchronous>, transform_indices = @transform_9, window_bounds = array<i64: 1, 128>}, {pipeline_mode = #tpu.pipeline_mode<synchronous>, transform_indices = @transform_10, window_bounds = array<i64: 128, 512>}, {pipeline_mode = #tpu.pipeline_mode<synchronous>, transform_indices = @transform_11, window_bounds = array<i64: 1, 512>}, {pipeline_mode = #tpu.pipeline_mode<synchronous>, transform_indices = @transform_12, window_bounds = array<i64: 512, 128>}, {pipeline_mode = #tpu.pipeline_mode<synchronous>, transform_indices = @transform_13, window_bounds = array<i64: 1, 128>}, {transform_indices = @transform_14, window_bounds = array<i64: 1, 16, 128>}]} {
    %c0 = arith.constant 0 : index
    %c0_0 = arith.constant 0 : index
    %c0_1 = arith.constant 0 : index
    %0 = vector.load %arg1[%c0, %c0_0, %c0_1] : memref<1x16x128xf32, #tpu.memory_space<vmem>>, vector<1x16x128xf32>
    %1 = vector.shape_cast %0 : vector<1x16x128xf32> to vector<16x128xf32>
    %c0_2 = arith.constant 0 : index
    %c0_3 = arith.constant 0 : index
    %2 = vector.load %arg2[%c0_2, %c0_3] : memref<16x16xf32, #tpu.memory_space<vmem>>, vector<16x16xf32>
    %c0_4 = arith.constant 0 : index
    %c0_5 = arith.constant 0 : index
    %3 = vector.load %arg3[%c0_4, %c0_5] : memref<1x128xf32, #tpu.memory_space<vmem>>, vector<1x128xf32>
    %c0_6 = arith.constant 0 : index
    %c0_7 = arith.constant 0 : index
    %4 = vector.load %arg4[%c0_6, %c0_7] : memref<1x128xf32, #tpu.memory_space<vmem>>, vector<1x128xf32>
    %cst = arith.constant dense<0.000000e+00> : vector<16xf32>
    %5 = vector.multi_reduction <add>, %1, %cst [1] : vector<16x128xf32> to vector<16xf32>
    %6 = vector.shape_cast %5 : vector<16xf32> to vector<16x1xf32>
    %cst_8 = arith.constant 1.280000e+02 : f32
    %7 = vector.broadcast %cst_8 : f32 to vector<16x1xf32>
    %8 = arith.divf %6, %7 : vector<16x1xf32>
    %9 = vector.broadcast %8 : vector<16x1xf32> to vector<16x128xf32>
    %10 = arith.subf %1, %9 : vector<16x128xf32>
    %11 = arith.mulf %10, %10 : vector<16x128xf32>
    %cst_9 = arith.constant dense<0.000000e+00> : vector<16xf32>
    %12 = vector.multi_reduction <add>, %11, %cst_9 [1] : vector<16x128xf32> to vector<16xf32>
    %13 = vector.shape_cast %12 : vector<16xf32> to vector<16x1xf32>
    %cst_10 = arith.constant 1.280000e+02 : f32
    %14 = vector.broadcast %cst_10 : f32 to vector<16x1xf32>
    %15 = arith.divf %13, %14 : vector<16x1xf32>
    %cst_11 = arith.constant 9.99999974E-6 : f32
    %16 = vector.broadcast %cst_11 : f32 to vector<16x1xf32>
    %17 = arith.addf %15, %16 : vector<16x1xf32>
    %18 = math.rsqrt %17 : vector<16x1xf32>
    %19 = vector.broadcast %18 : vector<16x1xf32> to vector<16x128xf32>
    %20 = arith.mulf %10, %19 : vector<16x128xf32>
    %21 = vector.broadcast %3 : vector<1x128xf32> to vector<16x128xf32>
    %22 = arith.mulf %20, %21 : vector<16x128xf32>
    %23 = vector.broadcast %4 : vector<1x128xf32> to vector<16x128xf32>
    %24 = arith.addf %22, %23 : vector<16x128xf32>
    %c0_12 = arith.constant 0 : index
    %c0_13 = arith.constant 0 : index
    %25 = vector.load %arg5[%c0_12, %c0_13] : memref<128x384xf32, #tpu.memory_space<vmem>>, vector<128x384xf32>
    %cst_14 = arith.constant dense<0.000000e+00> : vector<16x384xf32>
    %26 = tpu.matmul %24, %25, %cst_14 {dimension_numbers = #tpu.dot_dimension_numbers<[1], [0], [0], [1], [0, 0, 1, 1], [], []>} : vector<16x128xf32>, vector<128x384xf32>, vector<16x384xf32> -> vector<16x384xf32>
    %c0_15 = arith.constant 0 : index
    %c0_16 = arith.constant 0 : index
    %27 = vector.load %arg6[%c0_15, %c0_16] : memref<1x384xf32, #tpu.memory_space<vmem>>, vector<1x384xf32>
    %28 = vector.broadcast %27 : vector<1x384xf32> to vector<16x384xf32>
    %29 = arith.addf %26, %28 : vector<16x384xf32>
    %30 = vector.extract_strided_slice %29 {offsets = [0, 0], sizes = [16, 32], strides = [1, 1]} : vector<16x384xf32> to vector<16x32xf32>
    %cst_17 = arith.constant 0.176776692 : f32
    %31 = vector.broadcast %cst_17 : f32 to vector<16x32xf32>
    %32 = arith.mulf %30, %31 : vector<16x32xf32>
    %33 = vector.extract_strided_slice %29 {offsets = [0, 128], sizes = [16, 32], strides = [1, 1]} : vector<16x384xf32> to vector<16x32xf32>
    %34 = vector.extract_strided_slice %29 {offsets = [0, 256], sizes = [16, 32], strides = [1, 1]} : vector<16x384xf32> to vector<16x32xf32>
    %35 = tpu.transpose %33, [1, 0] : vector<16x32xf32> -> vector<32x16xf32>
    %cst_18 = arith.constant dense<0.000000e+00> : vector<16x16xf32>
    %36 = tpu.matmul %32, %35, %cst_18 {dimension_numbers = #tpu.dot_dimension_numbers<[1], [0], [0], [1], [0, 0, 1, 1], [], []>} : vector<16x32xf32>, vector<32x16xf32>, vector<16x16xf32> -> vector<16x16xf32>
    %37 = arith.addf %36, %2 : vector<16x16xf32>
    %cst_19 = arith.constant dense<0xFF800000> : vector<16xf32>
    %38 = vector.multi_reduction <maximumf>, %37, %cst_19 [1] : vector<16x16xf32> to vector<16xf32>
    %39 = vector.shape_cast %38 : vector<16xf32> to vector<16x1xf32>
    %40 = vector.broadcast %39 : vector<16x1xf32> to vector<16x16xf32>
    %41 = arith.subf %37, %40 : vector<16x16xf32>
    %42 = math.exp %41 : vector<16x16xf32>
    %cst_20 = arith.constant dense<0.000000e+00> : vector<16xf32>
    %43 = vector.multi_reduction <add>, %42, %cst_20 [1] : vector<16x16xf32> to vector<16xf32>
    %44 = vector.shape_cast %43 : vector<16xf32> to vector<16x1xf32>
    %cst_21 = arith.constant 1.000000e+00 : f32
    %45 = vector.broadcast %cst_21 : f32 to vector<16x1xf32>
    %46 = arith.divf %45, %44 : vector<16x1xf32>
    %47 = vector.broadcast %46 : vector<16x1xf32> to vector<16x16xf32>
    %48 = arith.mulf %42, %47 : vector<16x16xf32>
    %cst_22 = arith.constant dense<0.000000e+00> : vector<16x32xf32>
    %49 = tpu.matmul %48, %34, %cst_22 {dimension_numbers = #tpu.dot_dimension_numbers<[1], [0], [0], [1], [0, 0, 1, 1], [], []>} : vector<16x16xf32>, vector<16x32xf32>, vector<16x32xf32> -> vector<16x32xf32>
    %50 = vector.extract_strided_slice %29 {offsets = [0, 32], sizes = [16, 32], strides = [1, 1]} : vector<16x384xf32> to vector<16x32xf32>
    %cst_23 = arith.constant 0.176776692 : f32
    %51 = vector.broadcast %cst_23 : f32 to vector<16x32xf32>
    %52 = arith.mulf %50, %51 : vector<16x32xf32>
    %53 = vector.extract_strided_slice %29 {offsets = [0, 160], sizes = [16, 32], strides = [1, 1]} : vector<16x384xf32> to vector<16x32xf32>
    %54 = vector.extract_strided_slice %29 {offsets = [0, 288], sizes = [16, 32], strides = [1, 1]} : vector<16x384xf32> to vector<16x32xf32>
    %55 = tpu.transpose %53, [1, 0] : vector<16x32xf32> -> vector<32x16xf32>
    %cst_24 = arith.constant dense<0.000000e+00> : vector<16x16xf32>
    %56 = tpu.matmul %52, %55, %cst_24 {dimension_numbers = #tpu.dot_dimension_numbers<[1], [0], [0], [1], [0, 0, 1, 1], [], []>} : vector<16x32xf32>, vector<32x16xf32>, vector<16x16xf32> -> vector<16x16xf32>
    %57 = arith.addf %56, %2 : vector<16x16xf32>
    %cst_25 = arith.constant dense<0xFF800000> : vector<16xf32>
    %58 = vector.multi_reduction <maximumf>, %57, %cst_25 [1] : vector<16x16xf32> to vector<16xf32>
    %59 = vector.shape_cast %58 : vector<16xf32> to vector<16x1xf32>
    %60 = vector.broadcast %59 : vector<16x1xf32> to vector<16x16xf32>
    %61 = arith.subf %57, %60 : vector<16x16xf32>
    %62 = math.exp %61 : vector<16x16xf32>
    %cst_26 = arith.constant dense<0.000000e+00> : vector<16xf32>
    %63 = vector.multi_reduction <add>, %62, %cst_26 [1] : vector<16x16xf32> to vector<16xf32>
    %64 = vector.shape_cast %63 : vector<16xf32> to vector<16x1xf32>
    %cst_27 = arith.constant 1.000000e+00 : f32
    %65 = vector.broadcast %cst_27 : f32 to vector<16x1xf32>
    %66 = arith.divf %65, %64 : vector<16x1xf32>
    %67 = vector.broadcast %66 : vector<16x1xf32> to vector<16x16xf32>
    %68 = arith.mulf %62, %67 : vector<16x16xf32>
    %cst_28 = arith.constant dense<0.000000e+00> : vector<16x32xf32>
    %69 = tpu.matmul %68, %54, %cst_28 {dimension_numbers = #tpu.dot_dimension_numbers<[1], [0], [0], [1], [0, 0, 1, 1], [], []>} : vector<16x16xf32>, vector<16x32xf32>, vector<16x32xf32> -> vector<16x32xf32>
    %70 = vector.extract_strided_slice %29 {offsets = [0, 64], sizes = [16, 32], strides = [1, 1]} : vector<16x384xf32> to vector<16x32xf32>
    %cst_29 = arith.constant 0.176776692 : f32
    %71 = vector.broadcast %cst_29 : f32 to vector<16x32xf32>
    %72 = arith.mulf %70, %71 : vector<16x32xf32>
    %73 = vector.extract_strided_slice %29 {offsets = [0, 192], sizes = [16, 32], strides = [1, 1]} : vector<16x384xf32> to vector<16x32xf32>
    %74 = vector.extract_strided_slice %29 {offsets = [0, 320], sizes = [16, 32], strides = [1, 1]} : vector<16x384xf32> to vector<16x32xf32>
    %75 = tpu.transpose %73, [1, 0] : vector<16x32xf32> -> vector<32x16xf32>
    %cst_30 = arith.constant dense<0.000000e+00> : vector<16x16xf32>
    %76 = tpu.matmul %72, %75, %cst_30 {dimension_numbers = #tpu.dot_dimension_numbers<[1], [0], [0], [1], [0, 0, 1, 1], [], []>} : vector<16x32xf32>, vector<32x16xf32>, vector<16x16xf32> -> vector<16x16xf32>
    %77 = arith.addf %76, %2 : vector<16x16xf32>
    %cst_31 = arith.constant dense<0xFF800000> : vector<16xf32>
    %78 = vector.multi_reduction <maximumf>, %77, %cst_31 [1] : vector<16x16xf32> to vector<16xf32>
    %79 = vector.shape_cast %78 : vector<16xf32> to vector<16x1xf32>
    %80 = vector.broadcast %79 : vector<16x1xf32> to vector<16x16xf32>
    %81 = arith.subf %77, %80 : vector<16x16xf32>
    %82 = math.exp %81 : vector<16x16xf32>
    %cst_32 = arith.constant dense<0.000000e+00> : vector<16xf32>
    %83 = vector.multi_reduction <add>, %82, %cst_32 [1] : vector<16x16xf32> to vector<16xf32>
    %84 = vector.shape_cast %83 : vector<16xf32> to vector<16x1xf32>
    %cst_33 = arith.constant 1.000000e+00 : f32
    %85 = vector.broadcast %cst_33 : f32 to vector<16x1xf32>
    %86 = arith.divf %85, %84 : vector<16x1xf32>
    %87 = vector.broadcast %86 : vector<16x1xf32> to vector<16x16xf32>
    %88 = arith.mulf %82, %87 : vector<16x16xf32>
    %cst_34 = arith.constant dense<0.000000e+00> : vector<16x32xf32>
    %89 = tpu.matmul %88, %74, %cst_34 {dimension_numbers = #tpu.dot_dimension_numbers<[1], [0], [0], [1], [0, 0, 1, 1], [], []>} : vector<16x16xf32>, vector<16x32xf32>, vector<16x32xf32> -> vector<16x32xf32>
    %90 = vector.extract_strided_slice %29 {offsets = [0, 96], sizes = [16, 32], strides = [1, 1]} : vector<16x384xf32> to vector<16x32xf32>
    %cst_35 = arith.constant 0.176776692 : f32
    %91 = vector.broadcast %cst_35 : f32 to vector<16x32xf32>
    %92 = arith.mulf %90, %91 : vector<16x32xf32>
    %93 = vector.extract_strided_slice %29 {offsets = [0, 224], sizes = [16, 32], strides = [1, 1]} : vector<16x384xf32> to vector<16x32xf32>
    %94 = vector.extract_strided_slice %29 {offsets = [0, 352], sizes = [16, 32], strides = [1, 1]} : vector<16x384xf32> to vector<16x32xf32>
    %95 = tpu.transpose %93, [1, 0] : vector<16x32xf32> -> vector<32x16xf32>
    %cst_36 = arith.constant dense<0.000000e+00> : vector<16x16xf32>
    %96 = tpu.matmul %92, %95, %cst_36 {dimension_numbers = #tpu.dot_dimension_numbers<[1], [0], [0], [1], [0, 0, 1, 1], [], []>} : vector<16x32xf32>, vector<32x16xf32>, vector<16x16xf32> -> vector<16x16xf32>
    %97 = arith.addf %96, %2 : vector<16x16xf32>
    %cst_37 = arith.constant dense<0xFF800000> : vector<16xf32>
    %98 = vector.multi_reduction <maximumf>, %97, %cst_37 [1] : vector<16x16xf32> to vector<16xf32>
    %99 = vector.shape_cast %98 : vector<16xf32> to vector<16x1xf32>
    %100 = vector.broadcast %99 : vector<16x1xf32> to vector<16x16xf32>
    %101 = arith.subf %97, %100 : vector<16x16xf32>
    %102 = math.exp %101 : vector<16x16xf32>
    %cst_38 = arith.constant dense<0.000000e+00> : vector<16xf32>
    %103 = vector.multi_reduction <add>, %102, %cst_38 [1] : vector<16x16xf32> to vector<16xf32>
    %104 = vector.shape_cast %103 : vector<16xf32> to vector<16x1xf32>
    %cst_39 = arith.constant 1.000000e+00 : f32
    %105 = vector.broadcast %cst_39 : f32 to vector<16x1xf32>
    %106 = arith.divf %105, %104 : vector<16x1xf32>
    %107 = vector.broadcast %106 : vector<16x1xf32> to vector<16x16xf32>
    %108 = arith.mulf %102, %107 : vector<16x16xf32>
    %cst_40 = arith.constant dense<0.000000e+00> : vector<16x32xf32>
    %109 = tpu.matmul %108, %94, %cst_40 {dimension_numbers = #tpu.dot_dimension_numbers<[1], [0], [0], [1], [0, 0, 1, 1], [], []>} : vector<16x16xf32>, vector<16x32xf32>, vector<16x32xf32> -> vector<16x32xf32>
    %110 = tpu.concatenate %49, %69, %89, %109 in 1 : vector<16x32xf32>, vector<16x32xf32>, vector<16x32xf32>, vector<16x32xf32> -> vector<16x128xf32>
    %c0_41 = arith.constant 0 : index
    %c0_42 = arith.constant 0 : index
    %111 = vector.load %arg7[%c0_41, %c0_42] : memref<128x128xf32, #tpu.memory_space<vmem>>, vector<128x128xf32>
    %cst_43 = arith.constant dense<0.000000e+00> : vector<16x128xf32>
    %112 = tpu.matmul %110, %111, %cst_43 {dimension_numbers = #tpu.dot_dimension_numbers<[1], [0], [0], [1], [0, 0, 1, 1], [], []>} : vector<16x128xf32>, vector<128x128xf32>, vector<16x128xf32> -> vector<16x128xf32>
    %c0_44 = arith.constant 0 : index
    %c0_45 = arith.constant 0 : index
    %113 = vector.load %arg8[%c0_44, %c0_45] : memref<1x128xf32, #tpu.memory_space<vmem>>, vector<1x128xf32>
    %114 = vector.broadcast %113 : vector<1x128xf32> to vector<16x128xf32>
    %115 = arith.addf %112, %114 : vector<16x128xf32>
    %116 = arith.addf %1, %115 : vector<16x128xf32>
    %c0_46 = arith.constant 0 : index
    %c0_47 = arith.constant 0 : index
    %117 = vector.load %arg9[%c0_46, %c0_47] : memref<1x128xf32, #tpu.memory_space<vmem>>, vector<1x128xf32>
    %c0_48 = arith.constant 0 : index
    %c0_49 = arith.constant 0 : index
    %118 = vector.load %arg10[%c0_48, %c0_49] : memref<1x128xf32, #tpu.memory_space<vmem>>, vector<1x128xf32>
    %cst_50 = arith.constant dense<0.000000e+00> : vector<16xf32>
    %119 = vector.multi_reduction <add>, %116, %cst_50 [1] : vector<16x128xf32> to vector<16xf32>
    %120 = vector.shape_cast %119 : vector<16xf32> to vector<16x1xf32>
    %cst_51 = arith.constant 1.280000e+02 : f32
    %121 = vector.broadcast %cst_51 : f32 to vector<16x1xf32>
    %122 = arith.divf %120, %121 : vector<16x1xf32>
    %123 = vector.broadcast %122 : vector<16x1xf32> to vector<16x128xf32>
    %124 = arith.subf %116, %123 : vector<16x128xf32>
    %125 = arith.mulf %124, %124 : vector<16x128xf32>
    %cst_52 = arith.constant dense<0.000000e+00> : vector<16xf32>
    %126 = vector.multi_reduction <add>, %125, %cst_52 [1] : vector<16x128xf32> to vector<16xf32>
    %127 = vector.shape_cast %126 : vector<16xf32> to vector<16x1xf32>
    %cst_53 = arith.constant 1.280000e+02 : f32
    %128 = vector.broadcast %cst_53 : f32 to vector<16x1xf32>
    %129 = arith.divf %127, %128 : vector<16x1xf32>
    %cst_54 = arith.constant 9.99999974E-6 : f32
    %130 = vector.broadcast %cst_54 : f32 to vector<16x1xf32>
    %131 = arith.addf %129, %130 : vector<16x1xf32>
    %132 = math.rsqrt %131 : vector<16x1xf32>
    %133 = vector.broadcast %132 : vector<16x1xf32> to vector<16x128xf32>
    %134 = arith.mulf %124, %133 : vector<16x128xf32>
    %135 = vector.broadcast %117 : vector<1x128xf32> to vector<16x128xf32>
    %136 = arith.mulf %134, %135 : vector<16x128xf32>
    %137 = vector.broadcast %118 : vector<1x128xf32> to vector<16x128xf32>
    %138 = arith.addf %136, %137 : vector<16x128xf32>
    %c0_55 = arith.constant 0 : index
    %c0_56 = arith.constant 0 : index
    %139 = vector.load %arg11[%c0_55, %c0_56] : memref<128x512xf32, #tpu.memory_space<vmem>>, vector<128x512xf32>
    %cst_57 = arith.constant dense<0.000000e+00> : vector<16x512xf32>
    %140 = tpu.matmul %138, %139, %cst_57 {dimension_numbers = #tpu.dot_dimension_numbers<[1], [0], [0], [1], [0, 0, 1, 1], [], []>} : vector<16x128xf32>, vector<128x512xf32>, vector<16x512xf32> -> vector<16x512xf32>
    %c0_58 = arith.constant 0 : index
    %c0_59 = arith.constant 0 : index
    %141 = vector.load %arg12[%c0_58, %c0_59] : memref<1x512xf32, #tpu.memory_space<vmem>>, vector<1x512xf32>
    %142 = vector.broadcast %141 : vector<1x512xf32> to vector<16x512xf32>
    %143 = arith.addf %140, %142 : vector<16x512xf32>
    %cst_60 = arith.constant -1.702000e+00 : f32
    %144 = vector.broadcast %cst_60 : f32 to vector<16x512xf32>
    %145 = arith.mulf %144, %143 : vector<16x512xf32>
    %146 = math.exp %145 : vector<16x512xf32>
    %cst_61 = arith.constant 1.000000e+00 : f32
    %147 = vector.broadcast %cst_61 : f32 to vector<16x512xf32>
    %148 = arith.addf %147, %146 : vector<16x512xf32>
    %cst_62 = arith.constant 1.000000e+00 : f32
    %149 = vector.broadcast %cst_62 : f32 to vector<16x512xf32>
    %150 = arith.divf %149, %148 : vector<16x512xf32>
    %151 = arith.mulf %143, %150 : vector<16x512xf32>
    %c0_63 = arith.constant 0 : index
    %c0_64 = arith.constant 0 : index
    %152 = vector.load %arg13[%c0_63, %c0_64] : memref<512x128xf32, #tpu.memory_space<vmem>>, vector<512x128xf32>
    %cst_65 = arith.constant dense<0.000000e+00> : vector<16x128xf32>
    %153 = tpu.matmul %151, %152, %cst_65 {dimension_numbers = #tpu.dot_dimension_numbers<[1], [0], [0], [1], [0, 0, 1, 1], [], []>} : vector<16x512xf32>, vector<512x128xf32>, vector<16x128xf32> -> vector<16x128xf32>
    %c0_66 = arith.constant 0 : index
    %c0_67 = arith.constant 0 : index
    %154 = vector.load %arg14[%c0_66, %c0_67] : memref<1x128xf32, #tpu.memory_space<vmem>>, vector<1x128xf32>
    %155 = vector.broadcast %154 : vector<1x128xf32> to vector<16x128xf32>
    %156 = arith.addf %153, %155 : vector<16x128xf32>
    %157 = arith.addf %116, %156 : vector<16x128xf32>
    %c0_68 = arith.constant 0 : index
    %c0_69 = arith.constant 0 : index
    %c0_70 = arith.constant 0 : index
    %158 = vector.load %arg15[%c0_68, %c0_69, %c0_70] : memref<1x16x128xf32, #tpu.memory_space<vmem>>, vector<1x16x128xf32>
    %159 = vector.shape_cast %158 : vector<1x16x128xf32> to vector<16x128xf32>
    %160 = vector.shape_cast %157 : vector<16x128xf32> to vector<1x16x128xf32>
    tpu.vector_store %arg15[%c0_68, %c0_69, %c0_70], %160 {strides = array<i32>} : memref<1x16x128xf32, #tpu.memory_space<vmem>>, vector<1x16x128xf32>,
    return
  }
  func.func @transform_0(%arg0: i32) -> (i32, i32, i32) {
    %c0_i32 = arith.constant 0 : i32
    %c0_i32_0 = arith.constant 0 : i32
    %c0_i32_1 = arith.constant 0 : i32
    return %arg0, %c0_i32, %c0_i32_0 : i32, i32, i32
  }
  func.func @transform_1(%arg0: i32) -> (i32, i32) {
    %c0_i32 = arith.constant 0 : i32
    %c0_i32_0 = arith.constant 0 : i32
    %c0_i32_1 = arith.constant 0 : i32
    return %c0_i32, %c0_i32_0 : i32, i32
  }
  func.func @transform_2(%arg0: i32) -> (i32, i32) {
    %c0_i32 = arith.constant 0 : i32
    %c0_i32_0 = arith.constant 0 : i32
    %c0_i32_1 = arith.constant 0 : i32
    return %c0_i32, %c0_i32_0 : i32, i32
  }
  func.func @transform_3(%arg0: i32) -> (i32, i32) {
    %c0_i32 = arith.constant 0 : i32
    %c0_i32_0 = arith.constant 0 : i32
    %c0_i32_1 = arith.constant 0 : i32
    return %c0_i32, %c0_i32_0 : i32, i32
  }
  func.func @transform_4(%arg0: i32) -> (i32, i32) {
    %c0_i32 = arith.constant 0 : i32
    %c0_i32_0 = arith.constant 0 : i32
    %c0_i32_1 = arith.constant 0 : i32
    return %c0_i32, %c0_i32_0 : i32, i32
  }
  func.func @transform_5(%arg0: i32) -> (i32, i32) {
    %c0_i32 = arith.constant 0 : i32
    %c0_i32_0 = arith.constant 0 : i32
    %c0_i32_1 = arith.constant 0 : i32
    return %c0_i32, %c0_i32_0 : i32, i32
  }
  func.func @transform_6(%arg0: i32) -> (i32, i32) {
    %c0_i32 = arith.constant 0 : i32
    %c0_i32_0 = arith.constant 0 : i32
    %c0_i32_1 = arith.constant 0 : i32
    return %c0_i32, %c0_i32_0 : i32, i32
  }
  func.func @transform_7(%arg0: i32) -> (i32, i32) {
    %c0_i32 = arith.constant 0 : i32
    %c0_i32_0 = arith.constant 0 : i32
    %c0_i32_1 = arith.constant 0 : i32
    return %c0_i32, %c0_i32_0 : i32, i32
  }
  func.func @transform_8(%arg0: i32) -> (i32, i32) {
    %c0_i32 = arith.constant 0 : i32
    %c0_i32_0 = arith.constant 0 : i32
    %c0_i32_1 = arith.constant 0 : i32
    return %c0_i32, %c0_i32_0 : i32, i32
  }
  func.func @transform_9(%arg0: i32) -> (i32, i32) {
    %c0_i32 = arith.constant 0 : i32
    %c0_i32_0 = arith.constant 0 : i32
    %c0_i32_1 = arith.constant 0 : i32
    return %c0_i32, %c0_i32_0 : i32, i32
  }
  func.func @transform_10(%arg0: i32) -> (i32, i32) {
    %c0_i32 = arith.constant 0 : i32
    %c0_i32_0 = arith.constant 0 : i32
    %c0_i32_1 = arith.constant 0 : i32
    return %c0_i32, %c0_i32_0 : i32, i32
  }
  func.func @transform_11(%arg0: i32) -> (i32, i32) {
    %c0_i32 = arith.constant 0 : i32
    %c0_i32_0 = arith.constant 0 : i32
    %c0_i32_1 = arith.constant 0 : i32
    return %c0_i32, %c0_i32_0 : i32, i32
  }
  func.func @transform_12(%arg0: i32) -> (i32, i32) {
    %c0_i32 = arith.constant 0 : i32
    %c0_i32_0 = arith.constant 0 : i32
    %c0_i32_1 = arith.constant 0 : i32
    return %c0_i32, %c0_i32_0 : i32, i32
  }
  func.func @transform_13(%arg0: i32) -> (i32, i32) {
    %c0_i32 = arith.constant 0 : i32
    %c0_i32_0 = arith.constant 0 : i32
    %c0_i32_1 = arith.constant 0 : i32
    return %c0_i32, %c0_i32_0 : i32, i32
  }
  func.func @transform_14(%arg0: i32) -> (i32, i32, i32) {
    %c0_i32 = arith.constant 0 : i32
    %c0_i32_0 = arith.constant 0 : i32
    %c0_i32_1 = arith.constant 0 : i32
    return %arg0, %c0_i32, %c0_i32_0 : i32, i32, i32
  }
}

</mosaic_0001>

<llo_original>
// kernel: tpu_custom_call.1
$region0: #{tpu_custom_call.1}
  #allocation0 [shape = 'u32[]', space=smem, size = 0x4, offset = 0x4, fixed_abs, tag = 'smem constant byte address 0x4 - core index']
  #allocation1 [shape = 'u32[144,128]{1,0:T(1,128)}', space=vmem, size = 0x12000, scoped, tag = 'internal scratch']
  %s0 = inlined_call_operand.hbm [shape: f32[2,16,128], index: 0, kind: input, shape index: {}]
  %s1 = inlined_call_operand.hbm [shape: f32[16,16], index: 1, kind: input, shape index: {}]
  %s2 = inlined_call_operand.hbm [shape: f32[1,128], index: 2, kind: input, shape index: {}]
  %s3 = inlined_call_operand.vmem [shape: f32[1,128], index: 3, kind: input, shape index: {}]
  %s4 = inlined_call_operand.hbm [shape: f32[128,384], index: 4, kind: input, shape index: {}]
  %s5 = inlined_call_operand.vmem [shape: f32[1,384], index: 5, kind: input, shape index: {}]
  %s6 = inlined_call_operand.hbm [shape: f32[128,128], index: 6, kind: input, shape index: {}]
  %s7 = inlined_call_operand.vmem [shape: f32[1,128], index: 7, kind: input, shape index: {}]
  %s8 = inlined_call_operand.vmem [shape: f32[1,128], index: 8, kind: input, shape index: {}]
  %s9 = inlined_call_operand.vmem [shape: f32[1,128], index: 9, kind: input, shape index: {}]
  %s10 = inlined_call_operand.hbm [shape: f32[128,512], index: 10, kind: input, shape index: {}]
  %s11 = inlined_call_operand.vmem [shape: f32[1,512], index: 11, kind: input, shape index: {}]
  %s12 = inlined_call_operand.hbm [shape: f32[512,128], index: 12, kind: input, shape index: {}]
  %s13 = inlined_call_operand.vmem [shape: f32[1,128], index: 13, kind: input, shape index: {}]
  %s14 = inlined_call_operand.hbm [shape: f32[2,16,128], index: 14, kind: output, shape index: {}]
  %s15 = sld [smem:[#allocation0]]
  $region117: #{tpu_custom_call.1} parent=0
    _
  %s17 = ssub.s32 1, %s15
  %s18 = scalar_select 0, %s17, %s15
  $region1: #{tpu_custom_call.1} parent=0
    #allocation2 [shape = 'u8[16384]{0}', space=vmem, size = 0x4000, scoped, tag = 'input window, operand 0']
    #allocation3 [shape = 's32[2]{0}', space=sflag, size = 0x8, scoped, tag = 'scoped memory for tpu_custom_call.1']
    #allocation4 [shape = 's32[2]{0}', space=sflag, size = 0x8, scoped, tag = 'scoped memory for tpu_custom_call.1']
    #allocation5 [shape = 'u8[8192]{0}', space=vmem, size = 0x2000, scoped, tag = 'input window, operand 1, single buffered']
    #allocation6 [shape = 's32[1]{0}', space=sflag, size = 0x4, scoped, tag = 'scoped memory for tpu_custom_call.1']
    #allocation7 [shape = 'u8[512]{0}', space=vmem, size = 0x400, scoped, tag = 'input window, operand 2, single buffered']
    #allocation8 [shape = 'u8[196608]{0}', space=vmem, size = 0x30000, scoped, tag = 'input window, operand 4, single buffered']
    #allocation9 [shape = 's32[1]{0}', space=sflag, size = 0x4, scoped, tag = 'scoped memory for tpu_custom_call.1']
    #allocation10 [shape = 'u8[65536]{0}', space=vmem, size = 0x10000, scoped, tag = 'input window, operand 6, single buffered']
    #allocation11 [shape = 'u8[262144]{0}', space=vmem, size = 0x40000, scoped, tag = 'input window, operand 10, single buffered']
    #allocation12 [shape = 's32[1]{0}', space=sflag, size = 0x4, scoped, tag = 'scoped memory for tpu_custom_call.1']
    #allocation13 [shape = 'u8[262144]{0}', space=vmem, size = 0x40000, scoped, tag = 'input window, operand 12, single buffered']
    #allocation14 [shape = 'u8[16384]{0}', space=vmem, size = 0x4000, scoped, tag = 'output window, operand 0']
    %19 = vsyncpa [#allocation3], 0
    %s20 = scalar_lea.sflag [#allocation3], 1
    %21 = vsyncpa %s20, 0
    %22 = vsyncpa [#allocation6], 0
    %23 = vsyncpa [#allocation9], 0
    %24 = vsyncpa [#allocation12], 0
    %25 = vsyncpa [#allocation4], 0
    %s26 = scalar_lea.sflag [#allocation4], 1
    %27 = vsyncpa %s26, 0
    loop: start=0, step=1, limit=4
    $region2: #{tpu_custom_call.1} parent=1 // loop_pre_header
      _
    $region3: #{tpu_custom_call.1} parent=1 // loop_header
      %s29 = sphi 0, %s33
      %p30 = scmp.ge.s32.totalorder %s29, 4
      %s39 = sphi 0, %s41
      %s42 = sphi 0, %s39
      %s43 = sphi 0, %s42
      %s59 = sphi 0, %s43
      %s63 = sphi 0, %s63
      %s65 = sphi 0, %s63
      %s66 = sphi 0, %s65
      %s80 = sphi 0, %s66
      %s84 = sphi 0, %s84
      %s86 = sphi 0, %s84
      %s87 = sphi 0, %s86
      %s101 = sphi 0, %s87
      %s105 = sphi 0, %s105
      %s107 = sphi 0, %s105
      %s108 = sphi 0, %s107
      %s122 = sphi 0, %s108
      %s126 = sphi 0, %s126
      %s128 = sphi 0, %s126
      %s129 = sphi 0, %s128
      %s143 = sphi 0, %s129
      %s147 = sphi 0, %s147
      %s149 = sphi 0, %s147
      %s150 = sphi 0, %s149
      %s164 = sphi 0, %s150
      %s168 = sphi 0, %s168
      %s170 = sphi 0, %s168
      %s171 = sphi 0, %s170
      %s185 = sphi 0, %s171
      %s189 = sphi 0, %s189
      %s191 = sphi 0, %s189
      %s192 = sphi 0, %s191
      %s206 = sphi 0, %s192
      %s210 = sphi 0, %s210
      %s212 = sphi 0, %s210
      %s213 = sphi 0, %s212
      %s227 = sphi 0, %s213
      %s231 = sphi 0, %s231
      %s233 = sphi 0, %s231
      %s234 = sphi 0, %s233
      %s248 = sphi 0, %s234
      %s252 = sphi 0, %s252
      %s254 = sphi 0, %s252
      %s255 = sphi 0, %s254
      %s269 = sphi 0, %s255
      %s273 = sphi 0, %s273
      %s275 = sphi 0, %s273
      %s276 = sphi 0, %s275
      %s290 = sphi 0, %s276
      %s294 = sphi 0, %s294
      %s296 = sphi 0, %s294
      %s297 = sphi 0, %s296
      %s311 = sphi 0, %s297
      %s315 = sphi 0, %s315
      %s317 = sphi 0, %s315
      %s318 = sphi 0, %s317
      %s332 = sphi 0, %s318
      %s338 = sphi 0, %s340
      %s341 = sphi 0, %s338
      %s342 = sphi 0, %s341
      %s358 = sphi 0, %s342
    $region4: #{tpu_custom_call.1} parent=1 // loop_header_branch
      %32 = sbr.rel (%p30) target = $region8
    $region5: #{tpu_custom_call.1} parent=1 // loop_body
      %s34 = ssub.s32 %s29, 1
      %s35 = ssub.s32 %s29, 2
      %s36 = sadd.s32 %s29, 1
      %s37 = ssub.s32 %s29, %s36
      %p38 = scmp.eq.s32.totalorder %s37, 0
      %s40 = sadd.s32 %s39, 1
      %s41 = scalar_select %p38, %s39, %s40
      %p44 = pneg %p38
      %p45 = scmp.eq.s32.totalorder %s29, 1
      %p46 = por %p44, %p45
      %p47 = scmp.ne.s32.totalorder %s39, %s42
      %p48 = scmp.eq.s32.totalorder %s29, 0
      %p49 = por %p47, %p48
      %p50 = scmp.ne.s32.totalorder %s39, %s42
      %p51 = scmp.eq.s32.totalorder %s34, 1
      %p52 = por %p50, %p51
      %p53 = scmp.ne.s32.totalorder %s42, %s43
      %p54 = scmp.eq.s32.totalorder %s34, 0
      %p55 = por %p53, %p54
      %p56 = scmp.ne.s32.totalorder %s42, %s43
      %p57 = scmp.eq.s32.totalorder %s35, 1
      %p58 = por %p56, %p57
      %p60 = scmp.ne.s32.totalorder %s43, %s59
      %p61 = scmp.eq.s32.totalorder %s35, 0
      %p62 = por %p60, %p61
      %s64 = sadd.s32 %s63, 1
      %p67 = scmp.eq.s32.totalorder %s29, 1
      %p68 = scmp.ne.s32.totalorder %s63, %s65
      %p69 = scmp.eq.s32.totalorder %s29, 0
      %p70 = por %p68, %p69
      %p71 = scmp.ne.s32.totalorder %s63, %s65
      %p72 = scmp.eq.s32.totalorder %s34, 1
      %p73 = por %p71, %p72
      %p74 = scmp.ne.s32.totalorder %s65, %s66
      %p75 = scmp.eq.s32.totalorder %s34, 0
      %p76 = por %p74, %p75
      %p77 = scmp.ne.s32.totalorder %s65, %s66
      %p78 = scmp.eq.s32.totalorder %s35, 1
      %p79 = por %p77, %p78
      %p81 = scmp.ne.s32.totalorder %s66, %s80
      %p82 = scmp.eq.s32.totalorder %s35, 0
      %p83 = por %p81, %p82
      %s85 = sadd.s32 %s84, 1
      %p88 = scmp.eq.s32.totalorder %s29, 1
      %p89 = scmp.ne.s32.totalorder %s84, %s86
      %p90 = scmp.eq.s32.totalorder %s29, 0
      %p91 = por %p89, %p90
      %p92 = scmp.ne.s32.totalorder %s84, %s86
      %p93 = scmp.eq.s32.totalorder %s34, 1
      %p94 = por %p92, %p93
      %p95 = scmp.ne.s32.totalorder %s86, %s87
      %p96 = scmp.eq.s32.totalorder %s34, 0
      %p97 = por %p95, %p96
      %p98 = scmp.ne.s32.totalorder %s86, %s87
      %p99 = scmp.eq.s32.totalorder %s35, 1
      %p100 = por %p98, %p99
      %p102 = scmp.ne.s32.totalorder %s87, %s101
      %p103 = scmp.eq.s32.totalorder %s35, 0
      %p104 = por %p102, %p103
      %s106 = sadd.s32 %s105, 1
      %p109 = scmp.eq.s32.totalorder %s29, 1
      %p110 = scmp.ne.s32.totalorder %s105, %s107
      %p111 = scmp.eq.s32.totalorder %s29, 0
      %p112 = por %p110, %p111
      %p113 = scmp.ne.s32.totalorder %s105, %s107
      %p114 = scmp.eq.s32.totalorder %s34, 1
      %p115 = por %p113, %p114
      %p116 = scmp.ne.s32.totalorder %s107, %s108
      %p117 = scmp.eq.s32.totalorder %s34, 0
      %p118 = por %p116, %p117
      %p119 = scmp.ne.s32.totalorder %s107, %s108
      %p120 = scmp.eq.s32.totalorder %s35, 1
      %p121 = por %p119, %p120
      %p123 = scmp.ne.s32.totalorder %s108, %s122
      %p124 = scmp.eq.s32.totalorder %s35, 0
      %p125 = por %p123, %p124
      %s127 = sadd.s32 %s126, 1
      %p130 = scmp.eq.s32.totalorder %s29, 1
      %p131 = scmp.ne.s32.totalorder %s126, %s128
      %p132 = scmp.eq.s32.totalorder %s29, 0
      %p133 = por %p131, %p132
      %p134 = scmp.ne.s32.totalorder %s126, %s128
      %p135 = scmp.eq.s32.totalorder %s34, 1
      %p136 = por %p134, %p135
      %p137 = scmp.ne.s32.totalorder %s128, %s129
      %p138 = scmp.eq.s32.totalorder %s34, 0
      %p139 = por %p137, %p138
      %p140 = scmp.ne.s32.totalorder %s128, %s129
      %p141 = scmp.eq.s32.totalorder %s35, 1
      %p142 = por %p140, %p141
      %p144 = scmp.ne.s32.totalorder %s129, %s143
      %p145 = scmp.eq.s32.totalorder %s35, 0
      %p146 = por %p144, %p145
      %s148 = sadd.s32 %s147, 1
      %p151 = scmp.eq.s32.totalorder %s29, 1
      %p152 = scmp.ne.s32.totalorder %s147, %s149
      %p153 = scmp.eq.s32.totalorder %s29, 0
      %p154 = por %p152, %p153
      %p155 = scmp.ne.s32.totalorder %s147, %s149
      %p156 = scmp.eq.s32.totalorder %s34, 1
      %p157 = por %p155, %p156
      %p158 = scmp.ne.s32.totalorder %s149, %s150
      %p159 = scmp.eq.s32.totalorder %s34, 0
      %p160 = por %p158, %p159
      %p161 = scmp.ne.s32.totalorder %s149, %s150
      %p162 = scmp.eq.s32.totalorder %s35, 1
      %p163 = por %p161, %p162
      %p165 = scmp.ne.s32.totalorder %s150, %s164
      %p166 = scmp.eq.s32.totalorder %s35, 0
      %p167 = por %p165, %p166
      %s169 = sadd.s32 %s168, 1
      %p172 = scmp.eq.s32.totalorder %s29, 1
      %p173 = scmp.ne.s32.totalorder %s168, %s170
      %p174 = scmp.eq.s32.totalorder %s29, 0
      %p175 = por %p173, %p174
      %p176 = scmp.ne.s32.totalorder %s168, %s170
      %p177 = scmp.eq.s32.totalorder %s34, 1
      %p178 = por %p176, %p177
      %p179 = scmp.ne.s32.totalorder %s170, %s171
      %p180 = scmp.eq.s32.totalorder %s34, 0
      %p181 = por %p179, %p180
      %p182 = scmp.ne.s32.totalorder %s170, %s171
      %p183 = scmp.eq.s32.totalorder %s35, 1
      %p184 = por %p182, %p183
      %p186 = scmp.ne.s32.totalorder %s171, %s185
      %p187 = scmp.eq.s32.totalorder %s35, 0
      %p188 = por %p186, %p187
      %s190 = sadd.s32 %s189, 1
      %p193 = scmp.eq.s32.totalorder %s29, 1
      %p194 = scmp.ne.s32.totalorder %s189, %s191
      %p195 = scmp.eq.s32.totalorder %s29, 0
      %p196 = por %p194, %p195
      %p197 = scmp.ne.s32.totalorder %s189, %s191
      %p198 = scmp.eq.s32.totalorder %s34, 1
      %p199 = por %p197, %p198
      %p200 = scmp.ne.s32.totalorder %s191, %s192
      %p201 = scmp.eq.s32.totalorder %s34, 0
      %p202 = por %p200, %p201
      %p203 = scmp.ne.s32.totalorder %s191, %s192
      %p204 = scmp.eq.s32.totalorder %s35, 1
      %p205 = por %p203, %p204
      %p207 = scmp.ne.s32.totalorder %s192, %s206
      %p208 = scmp.eq.s32.totalorder %s35, 0
      %p209 = por %p207, %p208
      %s211 = sadd.s32 %s210, 1
      %p214 = scmp.eq.s32.totalorder %s29, 1
      %p215 = scmp.ne.s32.totalorder %s210, %s212
      %p216 = scmp.eq.s32.totalorder %s29, 0
      %p217 = por %p215, %p216
      %p218 = scmp.ne.s32.totalorder %s210, %s212
      %p219 = scmp.eq.s32.totalorder %s34, 1
      %p220 = por %p218, %p219
      %p221 = scmp.ne.s32.totalorder %s212, %s213
      %p222 = scmp.eq.s32.totalorder %s34, 0
      %p223 = por %p221, %p222
      %p224 = scmp.ne.s32.totalorder %s212, %s213
      %p225 = scmp.eq.s32.totalorder %s35, 1
      %p226 = por %p224, %p225
      %p228 = scmp.ne.s32.totalorder %s213, %s227
      %p229 = scmp.eq.s32.totalorder %s35, 0
      %p230 = por %p228, %p229
      %s232 = sadd.s32 %s231, 1
      %p235 = scmp.eq.s32.totalorder %s29, 1
      %p236 = scmp.ne.s32.totalorder %s231, %s233
      %p237 = scmp.eq.s32.totalorder %s29, 0
      %p238 = por %p236, %p237
      %p239 = scmp.ne.s32.totalorder %s231, %s233
      %p240 = scmp.eq.s32.totalorder %s34, 1
      %p241 = por %p239, %p240
      %p242 = scmp.ne.s32.totalorder %s233, %s234
      %p243 = scmp.eq.s32.totalorder %s34, 0
      %p244 = por %p242, %p243
      %p245 = scmp.ne.s32.totalorder %s233, %s234
      %p246 = scmp.eq.s32.totalorder %s35, 1
      %p247 = por %p245, %p246
      %p249 = scmp.ne.s32.totalorder %s234, %s248
      %p250 = scmp.eq.s32.totalorder %s35, 0
      %p251 = por %p249, %p250
      %s253 = sadd.s32 %s252, 1
      %p256 = scmp.eq.s32.totalorder %s29, 1
      %p257 = scmp.ne.s32.totalorder %s252, %s254
      %p258 = scmp.eq.s32.totalorder %s29, 0
      %p259 = por %p257, %p258
      %p260 = scmp.ne.s32.totalorder %s252, %s254
      %p261 = scmp.eq.s32.totalorder %s34, 1
      %p262 = por %p260, %p261
      %p263 = scmp.ne.s32.totalorder %s254, %s255
      %p264 = scmp.eq.s32.totalorder %s34, 0
      %p265 = por %p263, %p264
      %p266 = scmp.ne.s32.totalorder %s254, %s255
      %p267 = scmp.eq.s32.totalorder %s35, 1
      %p268 = por %p266, %p267
      %p270 = scmp.ne.s32.totalorder %s255, %s269
      %p271 = scmp.eq.s32.totalorder %s35, 0
      %p272 = por %p270, %p271
      %s274 = sadd.s32 %s273, 1
      %p277 = scmp.eq.s32.totalorder %s29, 1
      %p278 = scmp.ne.s32.totalorder %s273, %s275
      %p279 = scmp.eq.s32.totalorder %s29, 0
      %p280 = por %p278, %p279
      %p281 = scmp.ne.s32.totalorder %s273, %s275
      %p282 = scmp.eq.s32.totalorder %s34, 1
      %p283 = por %p281, %p282
      %p284 = scmp.ne.s32.totalorder %s275, %s276
      %p285 = scmp.eq.s32.totalorder %s34, 0
      %p286 = por %p284, %p285
      %p287 = scmp.ne.s32.totalorder %s275, %s276
      %p288 = scmp.eq.s32.totalorder %s35, 1
      %p289 = por %p287, %p288
      %p291 = scmp.ne.s32.totalorder %s276, %s290
      %p292 = scmp.eq.s32.totalorder %s35, 0
      %p293 = por %p291, %p292
      %s295 = sadd.s32 %s294, 1
      %p298 = scmp.eq.s32.totalorder %s29, 1
      %p299 = scmp.ne.s32.totalorder %s294, %s296
      %p300 = scmp.eq.s32.totalorder %s29, 0
      %p301 = por %p299, %p300
      %p302 = scmp.ne.s32.totalorder %s294, %s296
      %p303 = scmp.eq.s32.totalorder %s34, 1
      %p304 = por %p302, %p303
      %p305 = scmp.ne.s32.totalorder %s296, %s297
      %p306 = scmp.eq.s32.totalorder %s34, 0
      %p307 = por %p305, %p306
      %p308 = scmp.ne.s32.totalorder %s296, %s297
      %p309 = scmp.eq.s32.totalorder %s35, 1
      %p310 = por %p308, %p309
      %p312 = scmp.ne.s32.totalorder %s297, %s311
      %p313 = scmp.eq.s32.totalorder %s35, 0
      %p314 = por %p312, %p313
      %s316 = sadd.s32 %s315, 1
      %p319 = scmp.eq.s32.totalorder %s29, 1
      %p320 = scmp.ne.s32.totalorder %s315, %s317
      %p321 = scmp.eq.s32.totalorder %s29, 0
      %p322 = por %p320, %p321
      %p323 = scmp.ne.s32.totalorder %s315, %s317
      %p324 = scmp.eq.s32.totalorder %s34, 1
      %p325 = por %p323, %p324
      %p326 = scmp.ne.s32.totalorder %s317, %s318
      %p327 = scmp.eq.s32.totalorder %s34, 0
      %p328 = por %p326, %p327
      %p329 = scmp.ne.s32.totalorder %s317, %s318
      %p330 = scmp.eq.s32.totalorder %s35, 1
      %p331 = por %p329, %p330
      %p333 = scmp.ne.s32.totalorder %s318, %s332
      %p334 = scmp.eq.s32.totalorder %s35, 0
      %p335 = por %p333, %p334
      %s336 = ssub.s32 %s29, %s36
      %p337 = scmp.eq.s32.totalorder %s336, 0
      %s339 = sadd.s32 %s338, 1
      %s340 = scalar_select %p337, %s338, %s339
      %p343 = pneg %p337
      %p344 = scmp.eq.s32.totalorder %s29, 1
      %p345 = por %p343, %p344
      %p346 = scmp.ne.s32.totalorder %s338, %s341
      %p347 = scmp.eq.s32.totalorder %s29, 0
      %p348 = por %p346, %p347
      %p349 = scmp.ne.s32.totalorder %s338, %s341
      %p350 = scmp.eq.s32.totalorder %s34, 1
      %p351 = por %p349, %p350
      %p352 = scmp.ne.s32.totalorder %s341, %s342
      %p353 = scmp.eq.s32.totalorder %s34, 0
      %p354 = por %p352, %p353
      %p355 = scmp.ne.s32.totalorder %s341, %s342
      %p356 = scmp.eq.s32.totalorder %s35, 1
      %p357 = por %p355, %p356
      %p359 = scmp.ne.s32.totalorder %s342, %s358
      %p360 = scmp.eq.s32.totalorder %s35, 0
      %p361 = por %p359, %p360
      %p362 = scmp.le.s32.totalorder 1, %s29
      %p363 = scmp.lt.s32.totalorder %s29, 3
      %p364 = pnand %p362, %p363
      %p365 = pneg %p364
      // Predicated region
      $region9: #{tpu_custom_call.1} parent=5 // pred_check
        _
      $region10: #{tpu_custom_call.1} parent=5 // pred_check_branch
        %367 = sbr.rel (%p364) target = $region12
      $region11: #{tpu_custom_call.1} parent=5 // pred_region
        %s368 = ssub.s32 %s29, 1
        // Predicated region
        $region13: #{tpu_custom_call.1} parent=11 // pred_check
          %p369 = pneg %p76
        $region14: #{tpu_custom_call.1} parent=11 // pred_check_branch
          %371 = sbr.rel (%p369) target = $region16
        $region15: #{tpu_custom_call.1} parent=11 // pred_region
          %s373 = ssub.s32 256, 256
          %374 = vsyncadd [#allocation6], %s373
          %s375 = sshll.u32 [#allocation5], 4
          %s376 = int_to_ptr.vmem [resolvable:$true] %s375
          %381 = dma.hbm_to_vmem [thread:$0]  %s1, 256, %s376, [#allocation6], 128, 128, 8
        $region16: #{tpu_custom_call.1} parent=11 // pred_fallthru
          _
        // Predicated region
        $region17: #{tpu_custom_call.1} parent=11 // pred_check
          %p382 = pneg %p97
        $region18: #{tpu_custom_call.1} parent=11 // pred_check_branch
          %384 = sbr.rel (%p382) target = $region20
        $region19: #{tpu_custom_call.1} parent=11 // pred_region
          %s386 = ssub.s32 16, 16
          %387 = vsyncadd [#allocation6], %s386
          %s389 = sshll.u32 [#allocation7], 4
          %s390 = int_to_ptr.vmem [resolvable:$true] %s389
          %392 = dma.hbm_to_vmem [thread:$0]  %s2, 16, %s390, [#allocation6]
        $region20: #{tpu_custom_call.1} parent=11 // pred_fallthru
          _
        // Predicated region
        $region21: #{tpu_custom_call.1} parent=11 // pred_check
          %p393 = pneg %p118
        $region22: #{tpu_custom_call.1} parent=11 // pred_check_branch
          %395 = sbr.rel (%p393) target = $region24
        $region23: #{tpu_custom_call.1} parent=11 // pred_region
          _
        $region24: #{tpu_custom_call.1} parent=11 // pred_fallthru
          _
        // Predicated region
        $region25: #{tpu_custom_call.1} parent=11 // pred_check
          %p396 = pneg %p139
        $region26: #{tpu_custom_call.1} parent=11 // pred_check_branch
          %398 = sbr.rel (%p396) target = $region28
        $region27: #{tpu_custom_call.1} parent=11 // pred_region
          %s400 = ssub.s32 6144, 6144
          %401 = vsyncadd [#allocation9], %s400
          %s402 = sshll.u32 [#allocation8], 4
          %s403 = int_to_ptr.vmem [resolvable:$true] %s402
          %408 = dma.hbm_to_vmem [thread:$0]  %s4, 6144, %s403, [#allocation9], 384, 384, 24
        $region28: #{tpu_custom_call.1} parent=11 // pred_fallthru
          _
        // Predicated region
        $region29: #{tpu_custom_call.1} parent=11 // pred_check
          %p409 = pneg %p160
        $region30: #{tpu_custom_call.1} parent=11 // pred_check_branch
          %411 = sbr.rel (%p409) target = $region32
        $region31: #{tpu_custom_call.1} parent=11 // pred_region
          _
        $region32: #{tpu_custom_call.1} parent=11 // pred_fallthru
          _
        // Predicated region
        $region33: #{tpu_custom_call.1} parent=11 // pred_check
          %p412 = pneg %p181
        $region34: #{tpu_custom_call.1} parent=11 // pred_check_branch
          %414 = sbr.rel (%p412) target = $region36
        $region35: #{tpu_custom_call.1} parent=11 // pred_region
          %s416 = ssub.s32 2048, 2048
          %417 = vsyncadd [#allocation9], %s416
          %s418 = sshll.u32 [#allocation10], 4
          %s419 = int_to_ptr.vmem [resolvable:$true] %s418
          %424 = dma.hbm_to_vmem [thread:$0]  %s6, 2048, %s419, [#allocation9], 128, 128, 8
        $region36: #{tpu_custom_call.1} parent=11 // pred_fallthru
          _
        // Predicated region
        $region37: #{tpu_custom_call.1} parent=11 // pred_check
          %p425 = pneg %p202
        $region38: #{tpu_custom_call.1} parent=11 // pred_check_branch
          %427 = sbr.rel (%p425) target = $region40
        $region39: #{tpu_custom_call.1} parent=11 // pred_region
          _
        $region40: #{tpu_custom_call.1} parent=11 // pred_fallthru
          _
        // Predicated region
        $region41: #{tpu_custom_call.1} parent=11 // pred_check
          %p428 = pneg %p223
        $region42: #{tpu_custom_call.1} parent=11 // pred_check_branch
          %430 = sbr.rel (%p428) target = $region44
        $region43: #{tpu_custom_call.1} parent=11 // pred_region
          _
        $region44: #{tpu_custom_call.1} parent=11 // pred_fallthru
          _
        // Predicated region
        $region45: #{tpu_custom_call.1} parent=11 // pred_check
          %p431 = pneg %p244
        $region46: #{tpu_custom_call.1} parent=11 // pred_check_branch
          %433 = sbr.rel (%p431) target = $region48
        $region47: #{tpu_custom_call.1} parent=11 // pred_region
          _
        $region48: #{tpu_custom_call.1} parent=11 // pred_fallthru
          _
        // Predicated region
        $region49: #{tpu_custom_call.1} parent=11 // pred_check
          %p434 = pneg %p265
        $region50: #{tpu_custom_call.1} parent=11 // pred_check_branch
          %436 = sbr.rel (%p434) target = $region52
        $region51: #{tpu_custom_call.1} parent=11 // pred_region
          %s438 = ssub.s32 8192, 8192
          %439 = vsyncadd [#allocation12], %s438
          %s440 = sshll.u32 [#allocation11], 4
          %s441 = int_to_ptr.vmem [resolvable:$true] %s440
          %446 = dma.hbm_to_vmem [thread:$0]  %s10, 8192, %s441, [#allocation12], 512, 512, 32
        $region52: #{tpu_custom_call.1} parent=11 // pred_fallthru
          _
        // Predicated region
        $region53: #{tpu_custom_call.1} parent=11 // pred_check
          %p447 = pneg %p286
        $region54: #{tpu_custom_call.1} parent=11 // pred_check_branch
          %449 = sbr.rel (%p447) target = $region56
        $region55: #{tpu_custom_call.1} parent=11 // pred_region
          _
        $region56: #{tpu_custom_call.1} parent=11 // pred_fallthru
          _
        // Predicated region
        $region57: #{tpu_custom_call.1} parent=11 // pred_check
          %p450 = pneg %p307
        $region58: #{tpu_custom_call.1} parent=11 // pred_check_branch
          %452 = sbr.rel (%p450) target = $region60
        $region59: #{tpu_custom_call.1} parent=11 // pred_region
          %s454 = ssub.s32 8192, 8192
          %455 = vsyncadd [#allocation12], %s454
          %s456 = sshll.u32 [#allocation13], 4
          %s457 = int_to_ptr.vmem [resolvable:$true] %s456
          %462 = dma.hbm_to_vmem [thread:$0]  %s12, 8192, %s457, [#allocation12], 128, 128, 8
        $region60: #{tpu_custom_call.1} parent=11 // pred_fallthru
          _
        // Predicated region
        $region61: #{tpu_custom_call.1} parent=11 // pred_check
          %p463 = pneg %p328
        $region62: #{tpu_custom_call.1} parent=11 // pred_check_branch
          %465 = sbr.rel (%p463) target = $region64
        $region63: #{tpu_custom_call.1} parent=11 // pred_region
          _
        $region64: #{tpu_custom_call.1} parent=11 // pred_fallthru
          _
      $region12: #{tpu_custom_call.1} parent=5 // pred_fallthru
        _
      %p466 = scmp.lt.s32.totalorder %s29, 2
      // Predicated region
      $region65: #{tpu_custom_call.1} parent=5 // pred_check
        %p467 = pneg %p466
      $region66: #{tpu_custom_call.1} parent=5 // pred_check_branch
        %469 = sbr.rel (%p467) target = $region68
      $region67: #{tpu_custom_call.1} parent=5 // pred_region
        // Predicated region
        $region69: #{tpu_custom_call.1} parent=67 // pred_check
          %p470 = pneg %p49
        $region70: #{tpu_custom_call.1} parent=67 // pred_check_branch
          %472 = sbr.rel (%p470) target = $region72
        $region71: #{tpu_custom_call.1} parent=67 // pred_region
          %s473 = sand.u32 %s39, 1
          %s474 = scalar_lea.sflag [#allocation3], %s473
          %s475 = sand.u32 %s39, 1
          %s476 = smul.addr %s475, 16
          %s477 = scalar_lea.vmem [#allocation2], %s476
          %s479 = ssub.s32 256, 256
          %480 = vsyncadd %s474, %s479
          %s481 = smul.addr %s29, 2
          %s482 = smul.addr %s481, 128
          %s483 = scalar_lea.hbm %s0, %s482
          %s484 = sshll.u32 %s477, 4
          %s485 = int_to_ptr.vmem [resolvable:$true] %s484
          %490 = dma.hbm_to_vmem [thread:$0]  %s483, 256, %s485, %s474, 128, 128, 8
        $region72: #{tpu_custom_call.1} parent=67 // pred_fallthru
          _
      $region68: #{tpu_custom_call.1} parent=5 // pred_fallthru
        _
      %p491 = scmp.le.s32.totalorder 1, %s29
      %p492 = scmp.lt.s32.totalorder %s29, 3
      %p493 = pnand %p491, %p492
      %p494 = pneg %p493
      // Predicated region
      $region73: #{tpu_custom_call.1} parent=5 // pred_check
        _
      $region74: #{tpu_custom_call.1} parent=5 // pred_check_branch
        %496 = sbr.rel (%p493) target = $region76
      $region75: #{tpu_custom_call.1} parent=5 // pred_region
        %s497 = ssub.s32 %s29, 1
        %s498 = sand.u32 %s42, 1
        %s499 = scalar_lea.sflag [#allocation3], %s498
        %s500 = sand.u32 %s42, 1
        %s501 = smul.addr %s500, 16
        %s502 = scalar_lea.vmem [#allocation2], %s501
        // Predicated region
        $region77: #{tpu_custom_call.1} parent=75 // pred_check
          %p503 = pneg %p55
        $region78: #{tpu_custom_call.1} parent=75 // pred_check_branch
          %505 = sbr.rel (%p503) target = $region80
        $region79: #{tpu_custom_call.1} parent=75 // pred_region
          %506 = dma.done %s499, 256
        $region80: #{tpu_custom_call.1} parent=75 // pred_fallthru
          _
        // Predicated region
        $region81: #{tpu_custom_call.1} parent=75 // pred_check
          %p507 = pneg %p76
        $region82: #{tpu_custom_call.1} parent=75 // pred_check_branch
          %509 = sbr.rel (%p507) target = $region84
        $region83: #{tpu_custom_call.1} parent=75 // pred_region
          %510 = dma.done [#allocation6], 256
        $region84: #{tpu_custom_call.1} parent=75 // pred_fallthru
          _
        // Predicated region
        $region85: #{tpu_custom_call.1} parent=75 // pred_check
          %p511 = pneg %p97
        $region86: #{tpu_custom_call.1} parent=75 // pred_check_branch
          %513 = sbr.rel (%p511) target = $region88
        $region87: #{tpu_custom_call.1} parent=75 // pred_region
          %514 = dma.done [#allocation6], 16
        $region88: #{tpu_custom_call.1} parent=75 // pred_fallthru
          _
        // Predicated region
        $region89: #{tpu_custom_call.1} parent=75 // pred_check
          %p515 = pneg %p139
        $region90: #{tpu_custom_call.1} parent=75 // pred_check_branch
          %517 = sbr.rel (%p515) target = $region92
        $region91: #{tpu_custom_call.1} parent=75 // pred_region
          %518 = dma.done [#allocation9], 6144
        $region92: #{tpu_custom_call.1} parent=75 // pred_fallthru
          _
        // Predicated region
        $region93: #{tpu_custom_call.1} parent=75 // pred_check
          %p519 = pneg %p181
        $region94: #{tpu_custom_call.1} parent=75 // pred_check_branch
          %521 = sbr.rel (%p519) target = $region96
        $region95: #{tpu_custom_call.1} parent=75 // pred_region
          %522 = dma.done [#allocation9], 2048
        $region96: #{tpu_custom_call.1} parent=75 // pred_fallthru
          _
        // Predicated region
        $region97: #{tpu_custom_call.1} parent=75 // pred_check
          %p523 = pneg %p265
        $region98: #{tpu_custom_call.1} parent=75 // pred_check_branch
          %525 = sbr.rel (%p523) target = $region100
        $region99: #{tpu_custom_call.1} parent=75 // pred_region
          %526 = dma.done [#allocation12], 8192
        $region100: #{tpu_custom_call.1} parent=75 // pred_fallthru
          _
        // Predicated region
        $region101: #{tpu_custom_call.1} parent=75 // pred_check
          %p527 = pneg %p307
        $region102: #{tpu_custom_call.1} parent=75 // pred_check_branch
          %529 = sbr.rel (%p527) target = $region104
        $region103: #{tpu_custom_call.1} parent=75 // pred_region
          %530 = dma.done [#allocation12], 8192
        $region104: #{tpu_custom_call.1} parent=75 // pred_fallthru
          _
        %s531 = sand.u32 %s42, 1
        %s532 = scalar_lea.sflag [#allocation3], %s531
        %s533 = sand.u32 %s42, 1
        %s534 = smul.addr %s533, 16
        %s535 = scalar_lea.vmem [#allocation2], %s534
        %p536 = pneg %p55
        %p537 = pneg %p52
        %p538 = pneg %p76
        %p539 = pneg %p73
        %p540 = pneg %p97
        %p541 = pneg %p94
        %p542 = pneg %p118
        %p543 = pneg %p115
        %p544 = pneg %p139
        %p545 = pneg %p136
        %p546 = pneg %p160
        %p547 = pneg %p157
        %p548 = pneg %p181
        %p549 = pneg %p178
        %p550 = pneg %p202
        %p551 = pneg %p199
        %p552 = pneg %p223
        %p553 = pneg %p220
        %p554 = pneg %p244
        %p555 = pneg %p241
        %p556 = pneg %p265
        %p557 = pneg %p262
        %p558 = pneg %p286
        %p559 = pneg %p283
        %p560 = pneg %p307
        %p561 = pneg %p304
        %p562 = pneg %p328
        %p563 = pneg %p325
        %p564 = pneg %p354
        %p565 = pneg %p351
        %s566 = sand.u32 %s341, 1
        %s567 = scalar_lea.sflag [#allocation4], %s566
        %s568 = sand.u32 %s341, 1
        %s569 = smul.addr %s568, 16
        %s570 = scalar_lea.vmem [#allocation14], %s569
        %v571 = vld [vmem:[%s502] sm:$0xff]
        %v572 = vld [vmem:[%s502 + $0x8] sm:$0xff]
        %v573 = vld [vmem:[#allocation5] sm:$0xff]
        %v574 = vld [vmem:[#allocation5 + $0x8] sm:$0xff]
        %v575 = vld [vmem:[#allocation7] sm:$0x1]
        %v576 = vld [vmem:[%s3] sm:$0x1]
        %577 = vadd.xlane.f32.xlu0 %v571
        %v578 = vpop.xlane.xlu0 %577
        %579 = vadd.xlane.f32.xlu0 %v572
        %v580 = vpop.xlane.xlu0 %579
        %v581 = vrcp.pop 128.0
        %v582 = vmul.f32 %v578, %v581
        %v583 = vmul.f32 %v580, %v581
        %v584 = vsub.f32 %v571, %v582
        %v585 = vsub.f32 %v572, %v583
        %v586 = vmul.f32 %v584, %v584
        %v587 = vmul.f32 %v585, %v585
        %588 = vadd.xlane.f32.xlu0 %v586
        %v589 = vpop.xlane.xlu0 %588
        %590 = vadd.xlane.f32.xlu0 %v587
        %v591 = vpop.xlane.xlu0 %590
        %v592 = vmul.f32 %v589, %v581
        %v593 = vmul.f32 %v591, %v581
        %v594 = vadd.f32 %v592, 1e-05
        %v595 = vadd.f32 %v593, 1e-05
        %v596 = vrsqrt.pop %v594
        %v597 = vrsqrt.pop %v595
        %v598 = vmul.f32 %v584, %v596
        %v599 = vmul.f32 %v585, %v597
        %v601 = vlaneseq
        %v602 = vshrl.u32 %v601, 7
        %v603 = vsub.s32 0, %v602
        %v604 = vrot.slane %v575, %v603
        %v606 = vmul.f32 %v598, %v604
        %v607 = vmul.f32 %v599, %v604
        %v609 = vlaneseq
        %v610 = vshrl.u32 %v609, 7
        %v611 = vsub.s32 0, %v610
        %v612 = vrot.slane %v576, %v611
        %v614 = vadd.f32 %v606, %v612
        %v615 = vadd.f32 %v607, %v612
        %v616 = vld [vmem:[#allocation8] sm:$0xff]
        %v617 = vld [vmem:[#allocation8 + $0x8] sm:$0xff]
        %v618 = vld [vmem:[#allocation8 + $0x10] sm:$0xff]
        %v619 = vld [vmem:[#allocation8 + $0x18] sm:$0xff]
        %v620 = vld [vmem:[#allocation8 + $0x20] sm:$0xff]
        %v621 = vld [vmem:[#allocation8 + $0x28] sm:$0xff]
        %v622 = vld [vmem:[#allocation8 + $0x30] sm:$0xff]
        %v623 = vld [vmem:[#allocation8 + $0x38] sm:$0xff]
        %v624 = vld [vmem:[#allocation8 + $0x40] sm:$0xff]
        %v625 = vld [vmem:[#allocation8 + $0x48] sm:$0xff]
        %v626 = vld [vmem:[#allocation8 + $0x50] sm:$0xff]
        %v627 = vld [vmem:[#allocation8 + $0x58] sm:$0xff]
        %v628 = vld [vmem:[#allocation8 + $0x60] sm:$0xff]
        %v629 = vld [vmem:[#allocation8 + $0x68] sm:$0xff]
        %v630 = vld [vmem:[#allocation8 + $0x70] sm:$0xff]
        %v631 = vld [vmem:[#allocation8 + $0x78] sm:$0xff]
        %v632 = vld [vmem:[#allocation8 + $0x80] sm:$0xff]
        %v633 = vld [vmem:[#allocation8 + $0x88] sm:$0xff]
        %v634 = vld [vmem:[#allocation8 + $0x90] sm:$0xff]
        %v635 = vld [vmem:[#allocation8 + $0x98] sm:$0xff]
        %v636 = vld [vmem:[#allocation8 + $0xa0] sm:$0xff]
        %v637 = vld [vmem:[#allocation8 + $0xa8] sm:$0xff]
        %v638 = vld [vmem:[#allocation8 + $0xb0] sm:$0xff]
        %v639 = vld [vmem:[#allocation8 + $0xb8] sm:$0xff]
        %v640 = vld [vmem:[#allocation8 + $0xc0] sm:$0xff]
        %v641 = vld [vmem:[#allocation8 + $0xc8] sm:$0xff]
        %v642 = vld [vmem:[#allocation8 + $0xd0] sm:$0xff]
        %v643 = vld [vmem:[#allocation8 + $0xd8] sm:$0xff]
        %v644 = vld [vmem:[#allocation8 + $0xe0] sm:$0xff]
        %v645 = vld [vmem:[#allocation8 + $0xe8] sm:$0xff]
        %v646 = vld [vmem:[#allocation8 + $0xf0] sm:$0xff]
        %v647 = vld [vmem:[#allocation8 + $0xf8] sm:$0xff]
        %v648 = vld [vmem:[#allocation8 + $0x100] sm:$0xff]
        %v649 = vld [vmem:[#allocation8 + $0x108] sm:$0xff]
        %v650 = vld [vmem:[#allocation8 + $0x110] sm:$0xff]
        %v651 = vld [vmem:[#allocation8 + $0x118] sm:$0xff]
        %v652 = vld [vmem:[#allocation8 + $0x120] sm:$0xff]
        %v653 = vld [vmem:[#allocation8 + $0x128] sm:$0xff]
        %v654 = vld [vmem:[#allocation8 + $0x130] sm:$0xff]
        %v655 = vld [vmem:[#allocation8 + $0x138] sm:$0xff]
        %v656 = vld [vmem:[#allocation8 + $0x140] sm:$0xff]
        %v657 = vld [vmem:[#allocation8 + $0x148] sm:$0xff]
        %v658 = vld [vmem:[#allocation8 + $0x150] sm:$0xff]
        %v659 = vld [vmem:[#allocation8 + $0x158] sm:$0xff]
        %v660 = vld [vmem:[#allocation8 + $0x160] sm:$0xff]
        %v661 = vld [vmem:[#allocation8 + $0x168] sm:$0xff]
        %v662 = vld [vmem:[#allocation8 + $0x170] sm:$0xff]
        %v663 = vld [vmem:[#allocation8 + $0x178] sm:$0xff]
        %v664 = vld [vmem:[%s5] sm:$0x7]
        %v666 = vlaneseq
        %v667 = vshrl.u32 %v666, 7
        %v668 = vsub.s32 0, %v667
        %v669 = vrot.slane %v664, %v668
        %v670 = vlaneseq
        %v671 = vshrl.u32 %v670, 7
        %v672 = vsub.s32 1, %v671
        %v673 = vrot.slane %v664, %v672
        %v674 = vlaneseq
        %v675 = vshrl.u32 %v674, 7
        %v676 = vsub.s32 2, %v675
        %v677 = vrot.slane %v664, %v676
        %681 = vmatprep.subr.mxu0 %v617
        %682 = vmatpush1.msra.mxu0 %v616
        %683 = vmatprep.subr.mxu0 %v620
        %684 = vmatpush1.msra.mxu0 %v619
        %685 = vmatprep.subr.mxu0 %v623
        %686 = vmatpush1.msra.mxu0 %v622
        %687 = vmatprep.subr.mxu0 %v626
        %688 = vmatpush1.msra.mxu0 %v625
        %689 = vmatprep.subr.mxu0 %v629
        %690 = vmatpush1.msra.mxu0 %v628
        %691 = vmatprep.subr.mxu0 %v632
        %692 = vmatpush1.msra.mxu0 %v631
        %693 = vmatprep.subr.mxu0 %v635
        %694 = vmatpush1.msra.mxu0 %v634
        %695 = vmatprep.subr.mxu0 %v638
        %696 = vmatpush1.msra.mxu0 %v637
        %697 = vmatprep.subr.mxu0 %v641
        %698 = vmatpush1.msra.mxu0 %v640
        %699 = vmatprep.subr.mxu0 %v644
        %700 = vmatpush1.msra.mxu0 %v643
        %701 = vmatprep.subr.mxu0 %v647
        %702 = vmatpush1.msra.mxu0 %v646
        %703 = vmatprep.subr.mxu0 %v650
        %704 = vmatpush1.msra.mxu0 %v649
        %705 = vmatprep.subr.mxu0 %v653
        %706 = vmatpush1.msra.mxu0 %v652
        %707 = vmatprep.subr.mxu0 %v656
        %708 = vmatpush1.msra.mxu0 %v655
        %709 = vmatprep.subr.mxu0 %v659
        %710 = vmatpush1.msra.mxu0 %v658
        %711 = vmatprep.subr.mxu0 %v662
        %712 = vmatpush1.msra.mxu0 %v661
        %713 = vmatprep.subr.mxu0 0.0
        %714 = vmatpush1.msra.mxu0 0.0
        %715 = vmatprep.subr.mxu0 0.0
        %716 = vmatpush1.msra.mxu0 0.0
        %717 = vmatprep.subr.mxu0 0.0
        %718 = vmatpush1.msra.mxu0 0.0
        %719 = vmatprep.subr.mxu0 0.0
        %720 = vmatpush1.msra.mxu0 0.0
        %721 = vmatprep.subr.mxu0 0.0
        %722 = vmatpush1.msra.mxu0 0.0
        %723 = vmatprep.subr.mxu0 0.0
        %724 = vmatpush1.msra.mxu0 0.0
        %725 = vmatprep.subr.mxu0 0.0
        %726 = vmatpush1.msra.mxu0 0.0
        %727 = vmatprep.subr.mxu0 0.0
        %728 = vmatpush1.msra.mxu0 0.0
        %729 = vmatprep.subr.mxu0 0.0
        %730 = vmatpush1.msra.mxu0 0.0
        %731 = vmatprep.subr.mxu0 0.0
        %732 = vmatpush1.msra.mxu0 0.0
        %733 = vmatprep.subr.mxu0 0.0
        %734 = vmatpush1.msra.mxu0 0.0
        %735 = vmatprep.subr.mxu0 0.0
        %736 = vmatpush1.msra.mxu0 0.0
        %737 = vmatprep.subr.mxu0 0.0
        %738 = vmatpush1.msra.mxu0 0.0
        %739 = vmatprep.subr.mxu0 0.0
        %740 = vmatpush1.msra.mxu0 0.0
        %741 = vmatprep.subr.mxu0 0.0
        %742 = vmatpush1.msra.mxu0 0.0
        %743 = vmatprep.subr.mxu0 0.0
        %744 = vmatpush1.msra.mxu0 0.0
        %745 = vmatprep.mubr.f32.mxu0 0.0
        %746 = vmatmul.mubr.f32.gmra.mrb[0].mxu0 %v614
        %v747 = vpop.f32.mrb[0].mxu0
        %v748 = vadd.f32 %v669, %v747
        %v749 = vpop.f32.mrb[0].mxu0
        %v750 = vadd.f32 %v673, %v749
        %751 = vmatprep.mubr.f32.mxu0 0.0
        %752 = vmatmul.mubr.f32.gmra.mrb[0].mxu0 %v615
        %v753 = vpop.f32.mrb[0].mxu0
        %v754 = vadd.f32 %v669, %v753
        %v755 = vpop.f32.mrb[0].mxu0
        %v756 = vadd.f32 %v673, %v755
        %757 = vdwg.mxu0
        %758 = vmatprep.subr.mxu0 0.0
        %759 = vmatpush1.msra.mxu0 %v618
        %760 = vmatprep.subr.mxu0 0.0
        %761 = vmatpush1.msra.mxu0 %v621
        %762 = vmatprep.subr.mxu0 0.0
        %763 = vmatpush1.msra.mxu0 %v624
        %764 = vmatprep.subr.mxu0 0.0
        %765 = vmatpush1.msra.mxu0 %v627
        %766 = vmatprep.subr.mxu0 0.0
        %767 = vmatpush1.msra.mxu0 %v630
        %768 = vmatprep.subr.mxu0 0.0
        %769 = vmatpush1.msra.mxu0 %v633
        %770 = vmatprep.subr.mxu0 0.0
        %771 = vmatpush1.msra.mxu0 %v636
        %772 = vmatprep.subr.mxu0 0.0
        %773 = vmatpush1.msra.mxu0 %v639
        %774 = vmatprep.subr.mxu0 0.0
        %775 = vmatpush1.msra.mxu0 %v642
        %776 = vmatprep.subr.mxu0 0.0
        %777 = vmatpush1.msra.mxu0 %v645
        %778 = vmatprep.subr.mxu0 0.0
        %779 = vmatpush1.msra.mxu0 %v648
        %780 = vmatprep.subr.mxu0 0.0
        %781 = vmatpush1.msra.mxu0 %v651
        %782 = vmatprep.subr.mxu0 0.0
        %783 = vmatpush1.msra.mxu0 %v654
        %784 = vmatprep.subr.mxu0 0.0
        %785 = vmatpush1.msra.mxu0 %v657
        %786 = vmatprep.subr.mxu0 0.0
        %787 = vmatpush1.msra.mxu0 %v660
        %788 = vmatprep.subr.mxu0 0.0
        %789 = vmatpush1.msra.mxu0 %v663
        %790 = vmatprep.subr.mxu0 0.0
        %791 = vmatpush1.msra.mxu0 0.0
        %792 = vmatprep.subr.mxu0 0.0
        %793 = vmatpush1.msra.mxu0 0.0
        %794 = vmatprep.subr.mxu0 0.0
        %795 = vmatpush1.msra.mxu0 0.0
        %796 = vmatprep.subr.mxu0 0.0
        %797 = vmatpush1.msra.mxu0 0.0
        %798 = vmatprep.subr.mxu0 0.0
        %799 = vmatpush1.msra.mxu0 0.0
        %800 = vmatprep.subr.mxu0 0.0
        %801 = vmatpush1.msra.mxu0 0.0
        %802 = vmatprep.subr.mxu0 0.0
        %803 = vmatpush1.msra.mxu0 0.0
        %804 = vmatprep.subr.mxu0 0.0
        %805 = vmatpush1.msra.mxu0 0.0
        %806 = vmatprep.subr.mxu0 0.0
        %807 = vmatpush1.msra.mxu0 0.0
        %808 = vmatprep.subr.mxu0 0.0
        %809 = vmatpush1.msra.mxu0 0.0
        %810 = vmatprep.subr.mxu0 0.0
        %811 = vmatpush1.msra.mxu0 0.0
        %812 = vmatprep.subr.mxu0 0.0
        %813 = vmatpush1.msra.mxu0 0.0
        %814 = vmatprep.subr.mxu0 0.0
        %815 = vmatpush1.msra.mxu0 0.0
        %816 = vmatprep.subr.mxu0 0.0
        %817 = vmatpush1.msra.mxu0 0.0
        %818 = vmatprep.subr.mxu0 0.0
        %819 = vmatpush1.msra.mxu0 0.0
        %820 = vmatprep.subr.mxu0 0.0
        %821 = vmatpush1.msra.mxu0 0.0
        %822 = vmatprep.mubr.f32.mxu0 0.0
        %823 = vmatmul.mubr.f32.gmra.mrb[0].mxu0 %v614
        %v824 = vpop.f32.mrb[0].mxu0
        %v825 = vadd.f32 %v677, %v824
        %v826 = vpop.f32.mrb[0].mxu0
        %827 = vmatprep.mubr.f32.mxu0 0.0
        %828 = vmatmul.mubr.f32.gmra.mrb[0].mxu0 %v615
        %v829 = vpop.f32.mrb[0].mxu0
        %v830 = vadd.f32 %v677, %v829
        %v831 = vpop.f32.mrb[0].mxu0
        %832 = vdwg.mxu0
        %v833 = vmul.f32 %v748, 0.17677669
        %v834 = vmul.f32 %v754, 0.17677669
        %vm835 = vcmask 261120
        %v837 = vsel %vm835, %v833, 0
        %v840 = vsel %vm835, %v834, 0
        %v843 = vsel %vm835, %v750, 0
        %v846 = vsel %vm835, %v756, 0
        %848 = vmatprep.subr.mxu0 0.0
        %849 = vmatpush1.xpose.msra.mxu0 %v843
        %850 = vmatprep.subr.mxu0 0.0
        %851 = vmatpush1.xpose.msra.mxu0 %v846
        %852 = vmatprep.subr.mxu0 0.0
        %853 = vmatpush1.xpose.msra.mxu0 0.0
        %854 = vmatprep.subr.mxu0 0.0
        %855 = vmatpush1.xpose.msra.mxu0 0.0
        %856 = vmatprep.subr.mxu0 0.0
        %857 = vmatpush1.xpose.msra.mxu0 0.0
        %858 = vmatprep.subr.mxu0 0.0
        %859 = vmatpush1.xpose.msra.mxu0 0.0
        %860 = vmatprep.subr.mxu0 0.0
        %861 = vmatpush1.xpose.msra.mxu0 0.0
        %862 = vmatprep.subr.mxu0 0.0
        %863 = vmatpush1.xpose.msra.mxu0 0.0
        %864 = vmatprep.subr.mxu0 0.0
        %865 = vmatpush1.xpose.msra.mxu0 0.0
        %866 = vmatprep.subr.mxu0 0.0
        %867 = vmatpush1.xpose.msra.mxu0 0.0
        %868 = vmatprep.subr.mxu0 0.0
        %869 = vmatpush1.xpose.msra.mxu0 0.0
        %870 = vmatprep.subr.mxu0 0.0
        %871 = vmatpush1.xpose.msra.mxu0 0.0
        %872 = vmatprep.subr.mxu0 0.0
        %873 = vmatpush1.xpose.msra.mxu0 0.0
        %874 = vmatprep.subr.mxu0 0.0
        %875 = vmatpush1.xpose.msra.mxu0 0.0
        %876 = vmatprep.subr.mxu0 0.0
        %877 = vmatpush1.xpose.msra.mxu0 0.0
        %878 = vmatprep.subr.mxu0 0.0
        %879 = vmatpush1.xpose.msra.mxu0 0.0
        %880 = vmatprep.subr.mxu0 0.0
        %881 = vmatpush1.xpose.msra.mxu0 0.0
        %882 = vmatprep.subr.mxu0 0.0
        %883 = vmatpush1.xpose.msra.mxu0 0.0
        %884 = vmatprep.subr.mxu0 0.0
        %885 = vmatpush1.xpose.msra.mxu0 0.0
        %886 = vmatprep.subr.mxu0 0.0
        %887 = vmatpush1.xpose.msra.mxu0 0.0
        %888 = vmatprep.subr.mxu0 0.0
        %889 = vmatpush1.xpose.msra.mxu0 0.0
        %890 = vmatprep.subr.mxu0 0.0
        %891 = vmatpush1.xpose.msra.mxu0 0.0
        %892 = vmatprep.subr.mxu0 0.0
        %893 = vmatpush1.xpose.msra.mxu0 0.0
        %894 = vmatprep.subr.mxu0 0.0
        %895 = vmatpush1.xpose.msra.mxu0 0.0
        %896 = vmatprep.subr.mxu0 0.0
        %897 = vmatpush1.xpose.msra.mxu0 0.0
        %898 = vmatprep.subr.mxu0 0.0
        %899 = vmatpush1.xpose.msra.mxu0 0.0
        %900 = vmatprep.subr.mxu0 0.0
        %901 = vmatpush1.xpose.msra.mxu0 0.0
        %902 = vmatprep.subr.mxu0 0.0
        %903 = vmatpush1.xpose.msra.mxu0 0.0
        %904 = vmatprep.subr.mxu0 0.0
        %905 = vmatpush1.xpose.msra.mxu0 0.0
        %906 = vmatprep.subr.mxu0 0.0
        %907 = vmatpush1.xpose.msra.mxu0 0.0
        %908 = vmatprep.subr.mxu0 0.0
        %909 = vmatpush1.xpose.msra.mxu0 0.0
        %910 = vmatprep.subr.mxu0 0.0
        %911 = vmatpush1.xpose.msra.mxu0 0.0
        %912 = vmatprep.mubr.f32.mxu0 0.0
        %913 = vmatmul.mubr.f32.gmra.mrb[0].mxu0 %v837
        %v914 = vpop.f32.mrb[0].mxu0
        %v915 = vadd.f32 %v573, %v914
        %v916 = vpop.f32.mrb[0].mxu0
        %917 = vmatprep.mubr.f32.mxu0 0.0
        %918 = vmatmul.mubr.f32.gmra.mrb[0].mxu0 %v840
        %v919 = vpop.f32.mrb[0].mxu0
        %v920 = vadd.f32 %v574, %v919
        %v921 = vpop.f32.mrb[0].mxu0
        %922 = vdwg.mxu0
        %vm923 = vcmask 130048
        %v924 = vsel %vm923, %v915, -inf
        %925 = vmax.xlane.f32.xlu0 %v924
        %v926 = vpop.xlane.xlu0 %925
        %v927 = vsel %vm923, %v920, -inf
        %928 = vmax.xlane.f32.xlu0 %v927
        %v929 = vpop.xlane.xlu0 %928
        %v930 = vsub.f32 %v915, %v926
        %v931 = vsub.f32 %v920, %v929
        %v932 = vmul.f32 %v930, 1.442695
        %v933 = vpow.pop %v932
        %v934 = vmul.f32 %v931, 1.442695
        %v935 = vpow.pop %v934
        %v936 = vsel %vm923, %v933, 0.0
        %937 = vadd.xlane.f32.xlu0 %v936
        %v938 = vpop.xlane.xlu0 %937
        %v939 = vsel %vm923, %v935, 0.0
        %940 = vadd.xlane.f32.xlu0 %v939
        %v941 = vpop.xlane.xlu0 %940
        %v942 = vrcp.pop %v938
        %v943 = vmul.f32 1.0, %v942
        %v944 = vrcp.pop %v941
        %v945 = vmul.f32 1.0, %v944
        %v946 = vmul.f32 %v933, %v943
        %v947 = vmul.f32 %v935, %v945
        %v949 = vsel %vm923, %v946, 0
        %v952 = vsel %vm923, %v947, 0
        %954 = vmatprep.subr.mxu0 0.0
        %955 = vmatpush1.msra.mxu0 %v825
        %956 = vmatprep.subr.mxu0 0.0
        %957 = vmatpush1.msra.mxu0 %v830
        %958 = vmatprep.subr.mxu0 0.0
        %959 = vmatpush1.msra.mxu0 0.0
        %960 = vmatprep.subr.mxu0 0.0
        %961 = vmatpush1.msra.mxu0 0.0
        %962 = vmatprep.subr.mxu0 0.0
        %963 = vmatpush1.msra.mxu0 0.0
        %964 = vmatprep.subr.mxu0 0.0
        %965 = vmatpush1.msra.mxu0 0.0
        %966 = vmatprep.subr.mxu0 0.0
        %967 = vmatpush1.msra.mxu0 0.0
        %968 = vmatprep.subr.mxu0 0.0
        %969 = vmatpush1.msra.mxu0 0.0
        %970 = vmatprep.subr.mxu0 0.0
        %971 = vmatpush1.msra.mxu0 0.0
        %972 = vmatprep.subr.mxu0 0.0
        %973 = vmatpush1.msra.mxu0 0.0
        %974 = vmatprep.subr.mxu0 0.0
        %975 = vmatpush1.msra.mxu0 0.0
        %976 = vmatprep.subr.mxu0 0.0
        %977 = vmatpush1.msra.mxu0 0.0
        %978 = vmatprep.subr.mxu0 0.0
        %979 = vmatpush1.msra.mxu0 0.0
        %980 = vmatprep.subr.mxu0 0.0
        %981 = vmatpush1.msra.mxu0 0.0
        %982 = vmatprep.subr.mxu0 0.0
        %983 = vmatpush1.msra.mxu0 0.0
        %984 = vmatprep.subr.mxu0 0.0
        %985 = vmatpush1.msra.mxu0 0.0
        %986 = vmatprep.subr.mxu0 0.0
        %987 = vmatpush1.msra.mxu0 0.0
        %988 = vmatprep.subr.mxu0 0.0
        %989 = vmatpush1.msra.mxu0 0.0
        %990 = vmatprep.subr.mxu0 0.0
        %991 = vmatpush1.msra.mxu0 0.0
        %992 = vmatprep.subr.mxu0 0.0
        %993 = vmatpush1.msra.mxu0 0.0
        %994 = vmatprep.subr.mxu0 0.0
        %995 = vmatpush1.msra.mxu0 0.0
        %996 = vmatprep.subr.mxu0 0.0
        %997 = vmatpush1.msra.mxu0 0.0
        %998 = vmatprep.subr.mxu0 0.0
        %999 = vmatpush1.msra.mxu0 0.0
        %1000 = vmatprep.subr.mxu0 0.0
        %1001 = vmatpush1.msra.mxu0 0.0
        %1002 = vmatprep.subr.mxu0 0.0
        %1003 = vmatpush1.msra.mxu0 0.0
        %1004 = vmatprep.subr.mxu0 0.0
        %1005 = vmatpush1.msra.mxu0 0.0
        %1006 = vmatprep.subr.mxu0 0.0
        %1007 = vmatpush1.msra.mxu0 0.0
        %1008 = vmatprep.subr.mxu0 0.0
        %1009 = vmatpush1.msra.mxu0 0.0
        %1010 = vmatprep.subr.mxu0 0.0
        %1011 = vmatpush1.msra.mxu0 0.0
        %1012 = vmatprep.subr.mxu0 0.0
        %1013 = vmatpush1.msra.mxu0 0.0
        %1014 = vmatprep.subr.mxu0 0.0
        %1015 = vmatpush1.msra.mxu0 0.0
        %1016 = vmatprep.subr.mxu0 0.0
        %1017 = vmatpush1.msra.mxu0 0.0
        %1018 = vmatprep.mubr.f32.mxu0 0.0
        %1019 = vmatmul.mubr.f32.gmra.mrb[0].mxu0 %v949
        %v1020 = vpop.f32.mrb[0].mxu0
        %v1021 = vadd.f32 0.0, %v1020
        %v1022 = vpop.f32.mrb[0].mxu0
        %1023 = vmatprep.mubr.f32.mxu0 0.0
        %1024 = vmatmul.mubr.f32.gmra.mrb[0].mxu0 %v952
        %v1025 = vpop.f32.mrb[0].mxu0
        %v1026 = vadd.f32 0.0, %v1025
        %v1027 = vpop.f32.mrb[0].mxu0
        %1028 = vdwg.mxu0
        %1029 = vrot.lane.b32.xlu0 %v833, 96
        %v1030 = vpop.permute.xlu0 %1029
        %1031 = vrot.lane.b32.xlu0 %v834, 96
        %v1032 = vpop.permute.xlu0 %1031
        %1033 = vrot.lane.b32.xlu0 %v750, 96
        %v1034 = vpop.permute.xlu0 %1033
        %1035 = vrot.lane.b32.xlu0 %v756, 96
        %v1036 = vpop.permute.xlu0 %1035
        %v1037 = vsel %vm835, %v1030, 0
        %v1039 = vsel %vm835, %v1032, 0
        %v1041 = vsel %vm835, %v1034, 0
        %v1043 = vsel %vm835, %v1036, 0
        %1045 = vmatprep.subr.mxu0 0.0
        %1046 = vmatpush1.xpose.msra.mxu0 %v1041
        %1047 = vmatprep.subr.mxu0 0.0
        %1048 = vmatpush1.xpose.msra.mxu0 %v1043
        %1049 = vmatprep.subr.mxu0 0.0
        %1050 = vmatpush1.xpose.msra.mxu0 0.0
        %1051 = vmatprep.subr.mxu0 0.0
        %1052 = vmatpush1.xpose.msra.mxu0 0.0
        %1053 = vmatprep.subr.mxu0 0.0
        %1054 = vmatpush1.xpose.msra.mxu0 0.0
        %1055 = vmatprep.subr.mxu0 0.0
        %1056 = vmatpush1.xpose.msra.mxu0 0.0
        %1057 = vmatprep.subr.mxu0 0.0
        %1058 = vmatpush1.xpose.msra.mxu0 0.0
        %1059 = vmatprep.subr.mxu0 0.0
        %1060 = vmatpush1.xpose.msra.mxu0 0.0
        %1061 = vmatprep.subr.mxu0 0.0
        %1062 = vmatpush1.xpose.msra.mxu0 0.0
        %1063 = vmatprep.subr.mxu0 0.0
        %1064 = vmatpush1.xpose.msra.mxu0 0.0
        %1065 = vmatprep.subr.mxu0 0.0
        %1066 = vmatpush1.xpose.msra.mxu0 0.0
        %1067 = vmatprep.subr.mxu0 0.0
        %1068 = vmatpush1.xpose.msra.mxu0 0.0
        %1069 = vmatprep.subr.mxu0 0.0
        %1070 = vmatpush1.xpose.msra.mxu0 0.0
        %1071 = vmatprep.subr.mxu0 0.0
        %1072 = vmatpush1.xpose.msra.mxu0 0.0
        %1073 = vmatprep.subr.mxu0 0.0
        %1074 = vmatpush1.xpose.msra.mxu0 0.0
        %1075 = vmatprep.subr.mxu0 0.0
        %1076 = vmatpush1.xpose.msra.mxu0 0.0
        %1077 = vmatprep.subr.mxu0 0.0
        %1078 = vmatpush1.xpose.msra.mxu0 0.0
        %1079 = vmatprep.subr.mxu0 0.0
        %1080 = vmatpush1.xpose.msra.mxu0 0.0
        %1081 = vmatprep.subr.mxu0 0.0
        %1082 = vmatpush1.xpose.msra.mxu0 0.0
        %1083 = vmatprep.subr.mxu0 0.0
        %1084 = vmatpush1.xpose.msra.mxu0 0.0
        %1085 = vmatprep.subr.mxu0 0.0
        %1086 = vmatpush1.xpose.msra.mxu0 0.0
        %1087 = vmatprep.subr.mxu0 0.0
        %1088 = vmatpush1.xpose.msra.mxu0 0.0
        %1089 = vmatprep.subr.mxu0 0.0
        %1090 = vmatpush1.xpose.msra.mxu0 0.0
        %1091 = vmatprep.subr.mxu0 0.0
        %1092 = vmatpush1.xpose.msra.mxu0 0.0
        %1093 = vmatprep.subr.mxu0 0.0
        %1094 = vmatpush1.xpose.msra.mxu0 0.0
        %1095 = vmatprep.subr.mxu0 0.0
        %1096 = vmatpush1.xpose.msra.mxu0 0.0
        %1097 = vmatprep.subr.mxu0 0.0
        %1098 = vmatpush1.xpose.msra.mxu0 0.0
        %1099 = vmatprep.subr.mxu0 0.0
        %1100 = vmatpush1.xpose.msra.mxu0 0.0
        %1101 = vmatprep.subr.mxu0 0.0
        %1102 = vmatpush1.xpose.msra.mxu0 0.0
        %1103 = vmatprep.subr.mxu0 0.0
        %1104 = vmatpush1.xpose.msra.mxu0 0.0
        %1105 = vmatprep.subr.mxu0 0.0
        %1106 = vmatpush1.xpose.msra.mxu0 0.0
        %1107 = vmatprep.subr.mxu0 0.0
        %1108 = vmatpush1.xpose.msra.mxu0 0.0
        %1109 = vmatprep.mubr.f32.mxu0 0.0
        %1110 = vmatmul.mubr.f32.gmra.mrb[0].mxu0 %v1037
        %v1111 = vpop.f32.mrb[0].mxu0
        %v1112 = vadd.f32 %v573, %v1111
        %v1113 = vpop.f32.mrb[0].mxu0
        %1114 = vmatprep.mubr.f32.mxu0 0.0
        %1115 = vmatmul.mubr.f32.gmra.mrb[0].mxu0 %v1039
        %v1116 = vpop.f32.mrb[0].mxu0
        %v1117 = vadd.f32 %v574, %v1116
        %v1118 = vpop.f32.mrb[0].mxu0
        %1119 = vdwg.mxu0
        %v1120 = vsel %vm923, %v1112, -inf
        %1121 = vmax.xlane.f32.xlu0 %v1120
        %v1122 = vpop.xlane.xlu0 %1121
        %v1123 = vsel %vm923, %v1117, -inf
        %1124 = vmax.xlane.f32.xlu0 %v1123
        %v1125 = vpop.xlane.xlu0 %1124
        %v1126 = vsub.f32 %v1112, %v1122
        %v1127 = vsub.f32 %v1117, %v1125
        %v1128 = vmul.f32 %v1126, 1.442695
        %v1129 = vpow.pop %v1128
        %v1130 = vmul.f32 %v1127, 1.442695
        %v1131 = vpow.pop %v1130
        %v1132 = vsel %vm923, %v1129, 0.0
        %1133 = vadd.xlane.f32.xlu0 %v1132
        %v1134 = vpop.xlane.xlu0 %1133
        %v1135 = vsel %vm923, %v1131, 0.0
        %1136 = vadd.xlane.f32.xlu0 %v1135
        %v1137 = vpop.xlane.xlu0 %1136
        %v1138 = vrcp.pop %v1134
        %v1139 = vmul.f32 1.0, %v1138
        %v1140 = vrcp.pop %v1137
        %v1141 = vmul.f32 1.0, %v1140
        %v1142 = vmul.f32 %v1129, %v1139
        %v1143 = vmul.f32 %v1131, %v1141
        %1146 = vrot.lane.b32.xlu0 %v825, 96
        %v1147 = vpop.permute.xlu0 %1146
        %1148 = vrot.lane.b32.xlu0 %v830, 96
        %v1149 = vpop.permute.xlu0 %1148
        %v1153 = vsel %vm923, %v1142, 0
        %v1156 = vsel %vm923, %v1143, 0
        %1158 = vmatprep.subr.mxu0 0.0
        %1159 = vmatpush1.msra.mxu0 %v1147
        %1160 = vmatprep.subr.mxu0 0.0
        %1161 = vmatpush1.msra.mxu0 %v1149
        %1162 = vmatprep.subr.mxu0 0.0
        %1163 = vmatpush1.msra.mxu0 0.0
        %1164 = vmatprep.subr.mxu0 0.0
        %1165 = vmatpush1.msra.mxu0 0.0
        %1166 = vmatprep.subr.mxu0 0.0
        %1167 = vmatpush1.msra.mxu0 0.0
        %1168 = vmatprep.subr.mxu0 0.0
        %1169 = vmatpush1.msra.mxu0 0.0
        %1170 = vmatprep.subr.mxu0 0.0
        %1171 = vmatpush1.msra.mxu0 0.0
        %1172 = vmatprep.subr.mxu0 0.0
        %1173 = vmatpush1.msra.mxu0 0.0
        %1174 = vmatprep.subr.mxu0 0.0
        %1175 = vmatpush1.msra.mxu0 0.0
        %1176 = vmatprep.subr.mxu0 0.0
        %1177 = vmatpush1.msra.mxu0 0.0
        %1178 = vmatprep.subr.mxu0 0.0
        %1179 = vmatpush1.msra.mxu0 0.0
        %1180 = vmatprep.subr.mxu0 0.0
        %1181 = vmatpush1.msra.mxu0 0.0
        %1182 = vmatprep.subr.mxu0 0.0
        %1183 = vmatpush1.msra.mxu0 0.0
        %1184 = vmatprep.subr.mxu0 0.0
        %1185 = vmatpush1.msra.mxu0 0.0
        %1186 = vmatprep.subr.mxu0 0.0
        %1187 = vmatpush1.msra.mxu0 0.0
        %1188 = vmatprep.subr.mxu0 0.0
        %1189 = vmatpush1.msra.mxu0 0.0
        %1190 = vmatprep.subr.mxu0 0.0
        %1191 = vmatpush1.msra.mxu0 0.0
        %1192 = vmatprep.subr.mxu0 0.0
        %1193 = vmatpush1.msra.mxu0 0.0
        %1194 = vmatprep.subr.mxu0 0.0
        %1195 = vmatpush1.msra.mxu0 0.0
        %1196 = vmatprep.subr.mxu0 0.0
        %1197 = vmatpush1.msra.mxu0 0.0
        %1198 = vmatprep.subr.mxu0 0.0
        %1199 = vmatpush1.msra.mxu0 0.0
        %1200 = vmatprep.subr.mxu0 0.0
        %1201 = vmatpush1.msra.mxu0 0.0
        %1202 = vmatprep.subr.mxu0 0.0
        %1203 = vmatpush1.msra.mxu0 0.0
        %1204 = vmatprep.subr.mxu0 0.0
        %1205 = vmatpush1.msra.mxu0 0.0
        %1206 = vmatprep.subr.mxu0 0.0
        %1207 = vmatpush1.msra.mxu0 0.0
        %1208 = vmatprep.subr.mxu0 0.0
        %1209 = vmatpush1.msra.mxu0 0.0
        %1210 = vmatprep.subr.mxu0 0.0
        %1211 = vmatpush1.msra.mxu0 0.0
        %1212 = vmatprep.subr.mxu0 0.0
        %1213 = vmatpush1.msra.mxu0 0.0
        %1214 = vmatprep.subr.mxu0 0.0
        %1215 = vmatpush1.msra.mxu0 0.0
        %1216 = vmatprep.subr.mxu0 0.0
        %1217 = vmatpush1.msra.mxu0 0.0
        %1218 = vmatprep.subr.mxu0 0.0
        %1219 = vmatpush1.msra.mxu0 0.0
        %1220 = vmatprep.subr.mxu0 0.0
        %1221 = vmatpush1.msra.mxu0 0.0
        %1222 = vmatprep.mubr.f32.mxu0 0.0
        %1223 = vmatmul.mubr.f32.gmra.mrb[0].mxu0 %v1153
        %v1224 = vpop.f32.mrb[0].mxu0
        %v1225 = vadd.f32 0.0, %v1224
        %v1226 = vpop.f32.mrb[0].mxu0
        %1227 = vmatprep.mubr.f32.mxu0 0.0
        %1228 = vmatmul.mubr.f32.gmra.mrb[0].mxu0 %v1156
        %v1229 = vpop.f32.mrb[0].mxu0
        %v1230 = vadd.f32 0.0, %v1229
        %v1231 = vpop.f32.mrb[0].mxu0
        %1232 = vdwg.mxu0
        %1233 = vrot.lane.b32.xlu0 %v833, 64
        %v1234 = vpop.permute.xlu0 %1233
        %1235 = vrot.lane.b32.xlu0 %v834, 64
        %v1236 = vpop.permute.xlu0 %1235
        %1237 = vrot.lane.b32.xlu0 %v750, 64
        %v1238 = vpop.permute.xlu0 %1237
        %1239 = vrot.lane.b32.xlu0 %v756, 64
        %v1240 = vpop.permute.xlu0 %1239
        %v1241 = vsel %vm835, %v1234, 0
        %v1243 = vsel %vm835, %v1236, 0
        %v1245 = vsel %vm835, %v1238, 0
        %v1247 = vsel %vm835, %v1240, 0
        %1249 = vmatprep.subr.mxu0 0.0
        %1250 = vmatpush1.xpose.msra.mxu0 %v1245
        %1251 = vmatprep.subr.mxu0 0.0
        %1252 = vmatpush1.xpose.msra.mxu0 %v1247
        %1253 = vmatprep.subr.mxu0 0.0
        %1254 = vmatpush1.xpose.msra.mxu0 0.0
        %1255 = vmatprep.subr.mxu0 0.0
        %1256 = vmatpush1.xpose.msra.mxu0 0.0
        %1257 = vmatprep.subr.mxu0 0.0
        %1258 = vmatpush1.xpose.msra.mxu0 0.0
        %1259 = vmatprep.subr.mxu0 0.0
        %1260 = vmatpush1.xpose.msra.mxu0 0.0
        %1261 = vmatprep.subr.mxu0 0.0
        %1262 = vmatpush1.xpose.msra.mxu0 0.0
        %1263 = vmatprep.subr.mxu0 0.0
        %1264 = vmatpush1.xpose.msra.mxu0 0.0
        %1265 = vmatprep.subr.mxu0 0.0
        %1266 = vmatpush1.xpose.msra.mxu0 0.0
        %1267 = vmatprep.subr.mxu0 0.0
        %1268 = vmatpush1.xpose.msra.mxu0 0.0
        %1269 = vmatprep.subr.mxu0 0.0
        %1270 = vmatpush1.xpose.msra.mxu0 0.0
        %1271 = vmatprep.subr.mxu0 0.0
        %1272 = vmatpush1.xpose.msra.mxu0 0.0
        %1273 = vmatprep.subr.mxu0 0.0
        %1274 = vmatpush1.xpose.msra.mxu0 0.0
        %1275 = vmatprep.subr.mxu0 0.0
        %1276 = vmatpush1.xpose.msra.mxu0 0.0
        %1277 = vmatprep.subr.mxu0 0.0
        %1278 = vmatpush1.xpose.msra.mxu0 0.0
        %1279 = vmatprep.subr.mxu0 0.0
        %1280 = vmatpush1.xpose.msra.mxu0 0.0
        %1281 = vmatprep.subr.mxu0 0.0
        %1282 = vmatpush1.xpose.msra.mxu0 0.0
        %1283 = vmatprep.subr.mxu0 0.0
        %1284 = vmatpush1.xpose.msra.mxu0 0.0
        %1285 = vmatprep.subr.mxu0 0.0
        %1286 = vmatpush1.xpose.msra.mxu0 0.0
        %1287 = vmatprep.subr.mxu0 0.0
        %1288 = vmatpush1.xpose.msra.mxu0 0.0
        %1289 = vmatprep.subr.mxu0 0.0
        %1290 = vmatpush1.xpose.msra.mxu0 0.0
        %1291 = vmatprep.subr.mxu0 0.0
        %1292 = vmatpush1.xpose.msra.mxu0 0.0
        %1293 = vmatprep.subr.mxu0 0.0
        %1294 = vmatpush1.xpose.msra.mxu0 0.0
        %1295 = vmatprep.subr.mxu0 0.0
        %1296 = vmatpush1.xpose.msra.mxu0 0.0
        %1297 = vmatprep.subr.mxu0 0.0
        %1298 = vmatpush1.xpose.msra.mxu0 0.0
        %1299 = vmatprep.subr.mxu0 0.0
        %1300 = vmatpush1.xpose.msra.mxu0 0.0
        %1301 = vmatprep.subr.mxu0 0.0
        %1302 = vmatpush1.xpose.msra.mxu0 0.0
        %1303 = vmatprep.subr.mxu0 0.0
        %1304 = vmatpush1.xpose.msra.mxu0 0.0
        %1305 = vmatprep.subr.mxu0 0.0
        %1306 = vmatpush1.xpose.msra.mxu0 0.0
        %1307 = vmatprep.subr.mxu0 0.0
        %1308 = vmatpush1.xpose.msra.mxu0 0.0
        %1309 = vmatprep.subr.mxu0 0.0
        %1310 = vmatpush1.xpose.msra.mxu0 0.0
        %1311 = vmatprep.subr.mxu0 0.0
        %1312 = vmatpush1.xpose.msra.mxu0 0.0
        %1313 = vmatprep.mubr.f32.mxu0 0.0
        %1314 = vmatmul.mubr.f32.gmra.mrb[0].mxu0 %v1241
        %v1315 = vpop.f32.mrb[0].mxu0
        %v1316 = vadd.f32 %v573, %v1315
        %v1317 = vpop.f32.mrb[0].mxu0
        %1318 = vmatprep.mubr.f32.mxu0 0.0
        %1319 = vmatmul.mubr.f32.gmra.mrb[0].mxu0 %v1243
        %v1320 = vpop.f32.mrb[0].mxu0
        %v1321 = vadd.f32 %v574, %v1320
        %v1322 = vpop.f32.mrb[0].mxu0
        %1323 = vdwg.mxu0
        %v1324 = vsel %vm923, %v1316, -inf
        %1325 = vmax.xlane.f32.xlu0 %v1324
        %v1326 = vpop.xlane.xlu0 %1325
        %v1327 = vsel %vm923, %v1321, -inf
        %1328 = vmax.xlane.f32.xlu0 %v1327
        %v1329 = vpop.xlane.xlu0 %1328
        %v1330 = vsub.f32 %v1316, %v1326
        %v1331 = vsub.f32 %v1321, %v1329
        %v1332 = vmul.f32 %v1330, 1.442695
        %v1333 = vpow.pop %v1332
        %v1334 = vmul.f32 %v1331, 1.442695
        %v1335 = vpow.pop %v1334
        %v1336 = vsel %vm923, %v1333, 0.0
        %1337 = vadd.xlane.f32.xlu0 %v1336
        %v1338 = vpop.xlane.xlu0 %1337
        %v1339 = vsel %vm923, %v1335, 0.0
        %1340 = vadd.xlane.f32.xlu0 %v1339
        %v1341 = vpop.xlane.xlu0 %1340
        %v1342 = vrcp.pop %v1338
        %v1343 = vmul.f32 1.0, %v1342
        %v1344 = vrcp.pop %v1341
        %v1345 = vmul.f32 1.0, %v1344
        %v1346 = vmul.f32 %v1333, %v1343
        %v1347 = vmul.f32 %v1335, %v1345
        %1348 = vrot.lane.b32.xlu0 %v825, 64
        %v1349 = vpop.permute.xlu0 %1348
        %1350 = vrot.lane.b32.xlu0 %v830, 64
        %v1351 = vpop.permute.xlu0 %1350
        %v1355 = vsel %vm923, %v1346, 0
        %v1358 = vsel %vm923, %v1347, 0
        %1360 = vmatprep.subr.mxu0 0.0
        %1361 = vmatpush1.msra.mxu0 %v1349
        %1362 = vmatprep.subr.mxu0 0.0
        %1363 = vmatpush1.msra.mxu0 %v1351
        %1364 = vmatprep.subr.mxu0 0.0
        %1365 = vmatpush1.msra.mxu0 0.0
        %1366 = vmatprep.subr.mxu0 0.0
        %1367 = vmatpush1.msra.mxu0 0.0
        %1368 = vmatprep.subr.mxu0 0.0
        %1369 = vmatpush1.msra.mxu0 0.0
        %1370 = vmatprep.subr.mxu0 0.0
        %1371 = vmatpush1.msra.mxu0 0.0
        %1372 = vmatprep.subr.mxu0 0.0
        %1373 = vmatpush1.msra.mxu0 0.0
        %1374 = vmatprep.subr.mxu0 0.0
        %1375 = vmatpush1.msra.mxu0 0.0
        %1376 = vmatprep.subr.mxu0 0.0
        %1377 = vmatpush1.msra.mxu0 0.0
        %1378 = vmatprep.subr.mxu0 0.0
        %1379 = vmatpush1.msra.mxu0 0.0
        %1380 = vmatprep.subr.mxu0 0.0
        %1381 = vmatpush1.msra.mxu0 0.0
        %1382 = vmatprep.subr.mxu0 0.0
        %1383 = vmatpush1.msra.mxu0 0.0
        %1384 = vmatprep.subr.mxu0 0.0
        %1385 = vmatpush1.msra.mxu0 0.0
        %1386 = vmatprep.subr.mxu0 0.0
        %1387 = vmatpush1.msra.mxu0 0.0
        %1388 = vmatprep.subr.mxu0 0.0
        %1389 = vmatpush1.msra.mxu0 0.0
        %1390 = vmatprep.subr.mxu0 0.0
        %1391 = vmatpush1.msra.mxu0 0.0
        %1392 = vmatprep.subr.mxu0 0.0
        %1393 = vmatpush1.msra.mxu0 0.0
        %1394 = vmatprep.subr.mxu0 0.0
        %1395 = vmatpush1.msra.mxu0 0.0
        %1396 = vmatprep.subr.mxu0 0.0
        %1397 = vmatpush1.msra.mxu0 0.0
        %1398 = vmatprep.subr.mxu0 0.0
        %1399 = vmatpush1.msra.mxu0 0.0
        %1400 = vmatprep.subr.mxu0 0.0
        %1401 = vmatpush1.msra.mxu0 0.0
        %1402 = vmatprep.subr.mxu0 0.0
        %1403 = vmatpush1.msra.mxu0 0.0
        %1404 = vmatprep.subr.mxu0 0.0
        %1405 = vmatpush1.msra.mxu0 0.0
        %1406 = vmatprep.subr.mxu0 0.0
        %1407 = vmatpush1.msra.mxu0 0.0
        %1408 = vmatprep.subr.mxu0 0.0
        %1409 = vmatpush1.msra.mxu0 0.0
        %1410 = vmatprep.subr.mxu0 0.0
        %1411 = vmatpush1.msra.mxu0 0.0
        %1412 = vmatprep.subr.mxu0 0.0
        %1413 = vmatpush1.msra.mxu0 0.0
        %1414 = vmatprep.subr.mxu0 0.0
        %1415 = vmatpush1.msra.mxu0 0.0
        %1416 = vmatprep.subr.mxu0 0.0
        %1417 = vmatpush1.msra.mxu0 0.0
        %1418 = vmatprep.subr.mxu0 0.0
        %1419 = vmatpush1.msra.mxu0 0.0
        %1420 = vmatprep.subr.mxu0 0.0
        %1421 = vmatpush1.msra.mxu0 0.0
        %1422 = vmatprep.subr.mxu0 0.0
        %1423 = vmatpush1.msra.mxu0 0.0
        %1424 = vmatprep.mubr.f32.mxu0 0.0
        %1425 = vmatmul.mubr.f32.gmra.mrb[0].mxu0 %v1355
        %v1426 = vpop.f32.mrb[0].mxu0
        %v1427 = vadd.f32 0.0, %v1426
        %v1428 = vpop.f32.mrb[0].mxu0
        %1429 = vmatprep.mubr.f32.mxu0 0.0
        %1430 = vmatmul.mubr.f32.gmra.mrb[0].mxu0 %v1358
        %v1431 = vpop.f32.mrb[0].mxu0
        %v1432 = vadd.f32 0.0, %v1431
        %v1433 = vpop.f32.mrb[0].mxu0
        %1434 = vdwg.mxu0
        %1435 = vrot.lane.b32.xlu0 %v833, 32
        %v1436 = vpop.permute.xlu0 %1435
        %1437 = vrot.lane.b32.xlu0 %v834, 32
        %v1438 = vpop.permute.xlu0 %1437
        %1439 = vrot.lane.b32.xlu0 %v750, 32
        %v1440 = vpop.permute.xlu0 %1439
        %1441 = vrot.lane.b32.xlu0 %v756, 32
        %v1442 = vpop.permute.xlu0 %1441
        %v1443 = vsel %vm835, %v1436, 0
        %v1445 = vsel %vm835, %v1438, 0
        %v1447 = vsel %vm835, %v1440, 0
        %v1449 = vsel %vm835, %v1442, 0
        %1451 = vmatprep.subr.mxu0 0.0
        %1452 = vmatpush1.xpose.msra.mxu0 %v1447
        %1453 = vmatprep.subr.mxu0 0.0
        %1454 = vmatpush1.xpose.msra.mxu0 %v1449
        %1455 = vmatprep.subr.mxu0 0.0
        %1456 = vmatpush1.xpose.msra.mxu0 0.0
        %1457 = vmatprep.subr.mxu0 0.0
        %1458 = vmatpush1.xpose.msra.mxu0 0.0
        %1459 = vmatprep.subr.mxu0 0.0
        %1460 = vmatpush1.xpose.msra.mxu0 0.0
        %1461 = vmatprep.subr.mxu0 0.0
        %1462 = vmatpush1.xpose.msra.mxu0 0.0
        %1463 = vmatprep.subr.mxu0 0.0
        %1464 = vmatpush1.xpose.msra.mxu0 0.0
        %1465 = vmatprep.subr.mxu0 0.0
        %1466 = vmatpush1.xpose.msra.mxu0 0.0
        %1467 = vmatprep.subr.mxu0 0.0
        %1468 = vmatpush1.xpose.msra.mxu0 0.0
        %1469 = vmatprep.subr.mxu0 0.0
        %1470 = vmatpush1.xpose.msra.mxu0 0.0
        %1471 = vmatprep.subr.mxu0 0.0
        %1472 = vmatpush1.xpose.msra.mxu0 0.0
        %1473 = vmatprep.subr.mxu0 0.0
        %1474 = vmatpush1.xpose.msra.mxu0 0.0
        %1475 = vmatprep.subr.mxu0 0.0
        %1476 = vmatpush1.xpose.msra.mxu0 0.0
        %1477 = vmatprep.subr.mxu0 0.0
        %1478 = vmatpush1.xpose.msra.mxu0 0.0
        %1479 = vmatprep.subr.mxu0 0.0
        %1480 = vmatpush1.xpose.msra.mxu0 0.0
        %1481 = vmatprep.subr.mxu0 0.0
        %1482 = vmatpush1.xpose.msra.mxu0 0.0
        %1483 = vmatprep.subr.mxu0 0.0
        %1484 = vmatpush1.xpose.msra.mxu0 0.0
        %1485 = vmatprep.subr.mxu0 0.0
        %1486 = vmatpush1.xpose.msra.mxu0 0.0
        %1487 = vmatprep.subr.mxu0 0.0
        %1488 = vmatpush1.xpose.msra.mxu0 0.0
        %1489 = vmatprep.subr.mxu0 0.0
        %1490 = vmatpush1.xpose.msra.mxu0 0.0
        %1491 = vmatprep.subr.mxu0 0.0
        %1492 = vmatpush1.xpose.msra.mxu0 0.0
        %1493 = vmatprep.subr.mxu0 0.0
        %1494 = vmatpush1.xpose.msra.mxu0 0.0
        %1495 = vmatprep.subr.mxu0 0.0
        %1496 = vmatpush1.xpose.msra.mxu0 0.0
        %1497 = vmatprep.subr.mxu0 0.0
        %1498 = vmatpush1.xpose.msra.mxu0 0.0
        %1499 = vmatprep.subr.mxu0 0.0
        %1500 = vmatpush1.xpose.msra.mxu0 0.0
        %1501 = vmatprep.subr.mxu0 0.0
        %1502 = vmatpush1.xpose.msra.mxu0 0.0
        %1503 = vmatprep.subr.mxu0 0.0
        %1504 = vmatpush1.xpose.msra.mxu0 0.0
        %1505 = vmatprep.subr.mxu0 0.0
        %1506 = vmatpush1.xpose.msra.mxu0 0.0
        %1507 = vmatprep.subr.mxu0 0.0
        %1508 = vmatpush1.xpose.msra.mxu0 0.0
        %1509 = vmatprep.subr.mxu0 0.0
        %1510 = vmatpush1.xpose.msra.mxu0 0.0
        %1511 = vmatprep.subr.mxu0 0.0
        %1512 = vmatpush1.xpose.msra.mxu0 0.0
        %1513 = vmatprep.subr.mxu0 0.0
        %1514 = vmatpush1.xpose.msra.mxu0 0.0
        %1515 = vmatprep.mubr.f32.mxu0 0.0
        %1516 = vmatmul.mubr.f32.gmra.mrb[0].mxu0 %v1443
        %v1517 = vpop.f32.mrb[0].mxu0
        %v1518 = vadd.f32 %v573, %v1517
        %v1519 = vpop.f32.mrb[0].mxu0
        %1520 = vmatprep.mubr.f32.mxu0 0.0
        %1521 = vmatmul.mubr.f32.gmra.mrb[0].mxu0 %v1445
        %v1522 = vpop.f32.mrb[0].mxu0
        %v1523 = vadd.f32 %v574, %v1522
        %v1524 = vpop.f32.mrb[0].mxu0
        %1525 = vdwg.mxu0
        %v1526 = vsel %vm923, %v1518, -inf
        %1527 = vmax.xlane.f32.xlu0 %v1526
        %v1528 = vpop.xlane.xlu0 %1527
        %v1529 = vsel %vm923, %v1523, -inf
        %1530 = vmax.xlane.f32.xlu0 %v1529
        %v1531 = vpop.xlane.xlu0 %1530
        %v1532 = vsub.f32 %v1518, %v1528
        %v1533 = vsub.f32 %v1523, %v1531
        %v1534 = vmul.f32 %v1532, 1.442695
        %v1535 = vpow.pop %v1534
        %v1536 = vmul.f32 %v1533, 1.442695
        %v1537 = vpow.pop %v1536
        %v1538 = vsel %vm923, %v1535, 0.0
        %1539 = vadd.xlane.f32.xlu0 %v1538
        %v1540 = vpop.xlane.xlu0 %1539
        %v1541 = vsel %vm923, %v1537, 0.0
        %1542 = vadd.xlane.f32.xlu0 %v1541
        %v1543 = vpop.xlane.xlu0 %1542
        %v1544 = vrcp.pop %v1540
        %v1545 = vmul.f32 1.0, %v1544
        %v1546 = vrcp.pop %v1543
        %v1547 = vmul.f32 1.0, %v1546
        %v1548 = vmul.f32 %v1535, %v1545
        %v1549 = vmul.f32 %v1537, %v1547
        %1550 = vrot.lane.b32.xlu0 %v825, 32
        %v1551 = vpop.permute.xlu0 %1550
        %1552 = vrot.lane.b32.xlu0 %v830, 32
        %v1553 = vpop.permute.xlu0 %1552
        %v1557 = vsel %vm923, %v1548, 0
        %v1560 = vsel %vm923, %v1549, 0
        %1562 = vmatprep.subr.mxu0 0.0
        %1563 = vmatpush1.msra.mxu0 %v1551
        %1564 = vmatprep.subr.mxu0 0.0
        %1565 = vmatpush1.msra.mxu0 %v1553
        %1566 = vmatprep.subr.mxu0 0.0
        %1567 = vmatpush1.msra.mxu0 0.0
        %1568 = vmatprep.subr.mxu0 0.0
        %1569 = vmatpush1.msra.mxu0 0.0
        %1570 = vmatprep.subr.mxu0 0.0
        %1571 = vmatpush1.msra.mxu0 0.0
        %1572 = vmatprep.subr.mxu0 0.0
        %1573 = vmatpush1.msra.mxu0 0.0
        %1574 = vmatprep.subr.mxu0 0.0
        %1575 = vmatpush1.msra.mxu0 0.0
        %1576 = vmatprep.subr.mxu0 0.0
        %1577 = vmatpush1.msra.mxu0 0.0
        %1578 = vmatprep.subr.mxu0 0.0
        %1579 = vmatpush1.msra.mxu0 0.0
        %1580 = vmatprep.subr.mxu0 0.0
        %1581 = vmatpush1.msra.mxu0 0.0
        %1582 = vmatprep.subr.mxu0 0.0
        %1583 = vmatpush1.msra.mxu0 0.0
        %1584 = vmatprep.subr.mxu0 0.0
        %1585 = vmatpush1.msra.mxu0 0.0
        %1586 = vmatprep.subr.mxu0 0.0
        %1587 = vmatpush1.msra.mxu0 0.0
        %1588 = vmatprep.subr.mxu0 0.0
        %1589 = vmatpush1.msra.mxu0 0.0
        %1590 = vmatprep.subr.mxu0 0.0
        %1591 = vmatpush1.msra.mxu0 0.0
        %1592 = vmatprep.subr.mxu0 0.0
        %1593 = vmatpush1.msra.mxu0 0.0
        %1594 = vmatprep.subr.mxu0 0.0
        %1595 = vmatpush1.msra.mxu0 0.0
        %1596 = vmatprep.subr.mxu0 0.0
        %1597 = vmatpush1.msra.mxu0 0.0
        %1598 = vmatprep.subr.mxu0 0.0
        %1599 = vmatpush1.msra.mxu0 0.0
        %1600 = vmatprep.subr.mxu0 0.0
        %1601 = vmatpush1.msra.mxu0 0.0
        %1602 = vmatprep.subr.mxu0 0.0
        %1603 = vmatpush1.msra.mxu0 0.0
        %1604 = vmatprep.subr.mxu0 0.0
        %1605 = vmatpush1.msra.mxu0 0.0
        %1606 = vmatprep.subr.mxu0 0.0
        %1607 = vmatpush1.msra.mxu0 0.0
        %1608 = vmatprep.subr.mxu0 0.0
        %1609 = vmatpush1.msra.mxu0 0.0
        %1610 = vmatprep.subr.mxu0 0.0
        %1611 = vmatpush1.msra.mxu0 0.0
        %1612 = vmatprep.subr.mxu0 0.0
        %1613 = vmatpush1.msra.mxu0 0.0
        %1614 = vmatprep.subr.mxu0 0.0
        %1615 = vmatpush1.msra.mxu0 0.0
        %1616 = vmatprep.subr.mxu0 0.0
        %1617 = vmatpush1.msra.mxu0 0.0
        %1618 = vmatprep.subr.mxu0 0.0
        %1619 = vmatpush1.msra.mxu0 0.0
        %1620 = vmatprep.subr.mxu0 0.0
        %1621 = vmatpush1.msra.mxu0 0.0
        %1622 = vmatprep.subr.mxu0 0.0
        %1623 = vmatpush1.msra.mxu0 0.0
        %1624 = vmatprep.subr.mxu0 0.0
        %1625 = vmatpush1.msra.mxu0 0.0
        %1626 = vmatprep.mubr.f32.mxu0 0.0
        %1627 = vmatmul.mubr.f32.gmra.mrb[0].mxu0 %v1557
        %v1628 = vpop.f32.mrb[0].mxu0
        %v1629 = vadd.f32 0.0, %v1628
        %v1630 = vpop.f32.mrb[0].mxu0
        %1631 = vmatprep.mubr.f32.mxu0 0.0
        %1632 = vmatmul.mubr.f32.gmra.mrb[0].mxu0 %v1560
        %v1633 = vpop.f32.mrb[0].mxu0
        %v1634 = vadd.f32 0.0, %v1633
        %v1635 = vpop.f32.mrb[0].mxu0
        %1636 = vdwg.mxu0
        %1639 = vrot.lane.b32.xlu0 %v1225, 32
        %v1640 = vpop.permute.xlu0 %1639
        %1641 = vrot.lane.b32.xlu0 %v1230, 32
        %v1642 = vpop.permute.xlu0 %1641
        %1647 = vrot.lane.b32.xlu0 %v1427, 64
        %v1648 = vpop.permute.xlu0 %1647
        %1649 = vrot.lane.b32.xlu0 %v1432, 64
        %v1650 = vpop.permute.xlu0 %1649
        %1655 = vrot.lane.b32.xlu0 %v1629, 96
        %v1656 = vpop.permute.xlu0 %1655
        %1657 = vrot.lane.b32.xlu0 %v1634, 96
        %v1658 = vpop.permute.xlu0 %1657
        %v1661 = vsel %vm835, %v1021, %v1640
        %v1662 = vsel %vm835, %v1026, %v1642
        %vm1663 = vcmask 523264
        %v1664 = vsel %vm1663, %v1661, %v1648
        %v1665 = vsel %vm1663, %v1662, %v1650
        %vm1666 = vcmask 785408
        %v1667 = vsel %vm1666, %v1664, %v1656
        %v1668 = vsel %vm1666, %v1665, %v1658
        %v1669 = vld [vmem:[#allocation10] sm:$0xff]
        %v1670 = vld [vmem:[#allocation10 + $0x8] sm:$0xff]
        %v1671 = vld [vmem:[#allocation10 + $0x10] sm:$0xff]
        %v1672 = vld [vmem:[#allocation10 + $0x18] sm:$0xff]
        %v1673 = vld [vmem:[#allocation10 + $0x20] sm:$0xff]
        %v1674 = vld [vmem:[#allocation10 + $0x28] sm:$0xff]
        %v1675 = vld [vmem:[#allocation10 + $0x30] sm:$0xff]
        %v1676 = vld [vmem:[#allocation10 + $0x38] sm:$0xff]
        %v1677 = vld [vmem:[#allocation10 + $0x40] sm:$0xff]
        %v1678 = vld [vmem:[#allocation10 + $0x48] sm:$0xff]
        %v1679 = vld [vmem:[#allocation10 + $0x50] sm:$0xff]
        %v1680 = vld [vmem:[#allocation10 + $0x58] sm:$0xff]
        %v1681 = vld [vmem:[#allocation10 + $0x60] sm:$0xff]
        %v1682 = vld [vmem:[#allocation10 + $0x68] sm:$0xff]
        %v1683 = vld [vmem:[#allocation10 + $0x70] sm:$0xff]
        %v1684 = vld [vmem:[#allocation10 + $0x78] sm:$0xff]
        %v1685 = vld [vmem:[%s7] sm:$0x1]
        %v1687 = vlaneseq
        %v1688 = vshrl.u32 %v1687, 7
        %v1689 = vsub.s32 0, %v1688
        %v1690 = vrot.slane %v1685, %v1689
        %1692 = vmatprep.subr.mxu0 0.0
        %1693 = vmatpush1.msra.mxu0 %v1669
        %1694 = vmatprep.subr.mxu0 0.0
        %1695 = vmatpush1.msra.mxu0 %v1670
        %1696 = vmatprep.subr.mxu0 0.0
        %1697 = vmatpush1.msra.mxu0 %v1671
        %1698 = vmatprep.subr.mxu0 0.0
        %1699 = vmatpush1.msra.mxu0 %v1672
        %1700 = vmatprep.subr.mxu0 0.0
        %1701 = vmatpush1.msra.mxu0 %v1673
        %1702 = vmatprep.subr.mxu0 0.0
        %1703 = vmatpush1.msra.mxu0 %v1674
        %1704 = vmatprep.subr.mxu0 0.0
        %1705 = vmatpush1.msra.mxu0 %v1675
        %1706 = vmatprep.subr.mxu0 0.0
        %1707 = vmatpush1.msra.mxu0 %v1676
        %1708 = vmatprep.subr.mxu0 0.0
        %1709 = vmatpush1.msra.mxu0 %v1677
        %1710 = vmatprep.subr.mxu0 0.0
        %1711 = vmatpush1.msra.mxu0 %v1678
        %1712 = vmatprep.subr.mxu0 0.0
        %1713 = vmatpush1.msra.mxu0 %v1679
        %1714 = vmatprep.subr.mxu0 0.0
        %1715 = vmatpush1.msra.mxu0 %v1680
        %1716 = vmatprep.subr.mxu0 0.0
        %1717 = vmatpush1.msra.mxu0 %v1681
        %1718 = vmatprep.subr.mxu0 0.0
        %1719 = vmatpush1.msra.mxu0 %v1682
        %1720 = vmatprep.subr.mxu0 0.0
        %1721 = vmatpush1.msra.mxu0 %v1683
        %1722 = vmatprep.subr.mxu0 0.0
        %1723 = vmatpush1.msra.mxu0 %v1684
        %1724 = vmatprep.subr.mxu0 0.0
        %1725 = vmatpush1.msra.mxu0 0.0
        %1726 = vmatprep.subr.mxu0 0.0
        %1727 = vmatpush1.msra.mxu0 0.0
        %1728 = vmatprep.subr.mxu0 0.0
        %1729 = vmatpush1.msra.mxu0 0.0
        %1730 = vmatprep.subr.mxu0 0.0
        %1731 = vmatpush1.msra.mxu0 0.0
        %1732 = vmatprep.subr.mxu0 0.0
        %1733 = vmatpush1.msra.mxu0 0.0
        %1734 = vmatprep.subr.mxu0 0.0
        %1735 = vmatpush1.msra.mxu0 0.0
        %1736 = vmatprep.subr.mxu0 0.0
        %1737 = vmatpush1.msra.mxu0 0.0
        %1738 = vmatprep.subr.mxu0 0.0
        %1739 = vmatpush1.msra.mxu0 0.0
        %1740 = vmatprep.subr.mxu0 0.0
        %1741 = vmatpush1.msra.mxu0 0.0
        %1742 = vmatprep.subr.mxu0 0.0
        %1743 = vmatpush1.msra.mxu0 0.0
        %1744 = vmatprep.subr.mxu0 0.0
        %1745 = vmatpush1.msra.mxu0 0.0
        %1746 = vmatprep.subr.mxu0 0.0
        %1747 = vmatpush1.msra.mxu0 0.0
        %1748 = vmatprep.subr.mxu0 0.0
        %1749 = vmatpush1.msra.mxu0 0.0
        %1750 = vmatprep.subr.mxu0 0.0
        %1751 = vmatpush1.msra.mxu0 0.0
        %1752 = vmatprep.subr.mxu0 0.0
        %1753 = vmatpush1.msra.mxu0 0.0
        %1754 = vmatprep.subr.mxu0 0.0
        %1755 = vmatpush1.msra.mxu0 0.0
        %1756 = vmatprep.mubr.f32.mxu0 0.0
        %1757 = vmatmul.mubr.f32.gmra.mrb[0].mxu0 %v1667
        %v1758 = vpop.f32.mrb[0].mxu0
        %v1759 = vadd.f32 %v1690, %v1758
        %v1760 = vpop.f32.mrb[0].mxu0
        %1761 = vmatprep.mubr.f32.mxu0 0.0
        %1762 = vmatmul.mubr.f32.gmra.mrb[0].mxu0 %v1668
        %v1763 = vpop.f32.mrb[0].mxu0
        %v1764 = vadd.f32 %v1690, %v1763
        %v1765 = vpop.f32.mrb[0].mxu0
        %1766 = vdwg.mxu0
        %v1767 = vadd.f32 %v571, %v1759
        %v1768 = vadd.f32 %v572, %v1764
        %v1769 = vld [vmem:[%s8] sm:$0x1]
        %v1770 = vld [vmem:[%s9] sm:$0x1]
        %1771 = vadd.xlane.f32.xlu0 %v1767
        %v1772 = vpop.xlane.xlu0 %1771
        %1773 = vadd.xlane.f32.xlu0 %v1768
        %v1774 = vpop.xlane.xlu0 %1773
        %v1775 = vmul.f32 %v1772, %v581
        %v1776 = vmul.f32 %v1774, %v581
        %v1777 = vsub.f32 %v1767, %v1775
        %v1778 = vsub.f32 %v1768, %v1776
        %v1779 = vmul.f32 %v1777, %v1777
        %v1780 = vmul.f32 %v1778, %v1778
        %1781 = vadd.xlane.f32.xlu0 %v1779
        %v1782 = vpop.xlane.xlu0 %1781
        %1783 = vadd.xlane.f32.xlu0 %v1780
        %v1784 = vpop.xlane.xlu0 %1783
        %v1785 = vmul.f32 %v1782, %v581
        %v1786 = vmul.f32 %v1784, %v581
        %v1787 = vadd.f32 %v1785, 1e-05
        %v1788 = vadd.f32 %v1786, 1e-05
        %v1789 = vrsqrt.pop %v1787
        %v1790 = vrsqrt.pop %v1788
        %v1791 = vmul.f32 %v1777, %v1789
        %v1792 = vmul.f32 %v1778, %v1790
        %v1794 = vlaneseq
        %v1795 = vshrl.u32 %v1794, 7
        %v1796 = vsub.s32 0, %v1795
        %v1797 = vrot.slane %v1769, %v1796
        %v1799 = vmul.f32 %v1791, %v1797
        %v1800 = vmul.f32 %v1792, %v1797
        %v1802 = vlaneseq
        %v1803 = vshrl.u32 %v1802, 7
        %v1804 = vsub.s32 0, %v1803
        %v1805 = vrot.slane %v1770, %v1804
        %v1807 = vadd.f32 %v1799, %v1805
        %v1808 = vadd.f32 %v1800, %v1805
        %v1809 = vld [vmem:[#allocation11] sm:$0xff]
        %v1810 = vld [vmem:[#allocation11 + $0x8] sm:$0xff]
        %v1811 = vld [vmem:[#allocation11 + $0x10] sm:$0xff]
        %v1812 = vld [vmem:[#allocation11 + $0x18] sm:$0xff]
        %v1813 = vld [vmem:[#allocation11 + $0x20] sm:$0xff]
        %v1814 = vld [vmem:[#allocation11 + $0x28] sm:$0xff]
        %v1815 = vld [vmem:[#allocation11 + $0x30] sm:$0xff]
        %v1816 = vld [vmem:[#allocation11 + $0x38] sm:$0xff]
        %v1817 = vld [vmem:[#allocation11 + $0x40] sm:$0xff]
        %v1818 = vld [vmem:[#allocation11 + $0x48] sm:$0xff]
        %v1819 = vld [vmem:[#allocation11 + $0x50] sm:$0xff]
        %v1820 = vld [vmem:[#allocation11 + $0x58] sm:$0xff]
        %v1821 = vld [vmem:[#allocation11 + $0x60] sm:$0xff]
        %v1822 = vld [vmem:[#allocation11 + $0x68] sm:$0xff]
        %v1823 = vld [vmem:[#allocation11 + $0x70] sm:$0xff]
        %v1824 = vld [vmem:[#allocation11 + $0x78] sm:$0xff]
        %v1825 = vld [vmem:[#allocation11 + $0x80] sm:$0xff]
        %v1826 = vld [vmem:[#allocation11 + $0x88] sm:$0xff]
        %v1827 = vld [vmem:[#allocation11 + $0x90] sm:$0xff]
        %v1828 = vld [vmem:[#allocation11 + $0x98] sm:$0xff]
        %v1829 = vld [vmem:[#allocation11 + $0xa0] sm:$0xff]
        %v1830 = vld [vmem:[#allocation11 + $0xa8] sm:$0xff]
        %v1831 = vld [vmem:[#allocation11 + $0xb0] sm:$0xff]
        %v1832 = vld [vmem:[#allocation11 + $0xb8] sm:$0xff]
        %v1833 = vld [vmem:[#allocation11 + $0xc0] sm:$0xff]
        %v1834 = vld [vmem:[#allocation11 + $0xc8] sm:$0xff]
        %v1835 = vld [vmem:[#allocation11 + $0xd0] sm:$0xff]
        %v1836 = vld [vmem:[#allocation11 + $0xd8] sm:$0xff]
        %v1837 = vld [vmem:[#allocation11 + $0xe0] sm:$0xff]
        %v1838 = vld [vmem:[#allocation11 + $0xe8] sm:$0xff]
        %v1839 = vld [vmem:[#allocation11 + $0xf0] sm:$0xff]
        %v1840 = vld [vmem:[#allocation11 + $0xf8] sm:$0xff]
        %v1841 = vld [vmem:[#allocation11 + $0x100] sm:$0xff]
        %v1842 = vld [vmem:[#allocation11 + $0x108] sm:$0xff]
        %v1843 = vld [vmem:[#allocation11 + $0x110] sm:$0xff]
        %v1844 = vld [vmem:[#allocation11 + $0x118] sm:$0xff]
        %v1845 = vld [vmem:[#allocation11 + $0x120] sm:$0xff]
        %v1846 = vld [vmem:[#allocation11 + $0x128] sm:$0xff]
        %v1847 = vld [vmem:[#allocation11 + $0x130] sm:$0xff]
        %v1848 = vld [vmem:[#allocation11 + $0x138] sm:$0xff]
        %v1849 = vld [vmem:[#allocation11 + $0x140] sm:$0xff]
        %v1850 = vld [vmem:[#allocation11 + $0x148] sm:$0xff]
        %v1851 = vld [vmem:[#allocation11 + $0x150] sm:$0xff]
        %v1852 = vld [vmem:[#allocation11 + $0x158] sm:$0xff]
        %v1853 = vld [vmem:[#allocation11 + $0x160] sm:$0xff]
        %v1854 = vld [vmem:[#allocation11 + $0x168] sm:$0xff]
        %v1855 = vld [vmem:[#allocation11 + $0x170] sm:$0xff]
        %v1856 = vld [vmem:[#allocation11 + $0x178] sm:$0xff]
        %v1857 = vld [vmem:[#allocation11 + $0x180] sm:$0xff]
        %v1858 = vld [vmem:[#allocation11 + $0x188] sm:$0xff]
        %v1859 = vld [vmem:[#allocation11 + $0x190] sm:$0xff]
        %v1860 = vld [vmem:[#allocation11 + $0x198] sm:$0xff]
        %v1861 = vld [vmem:[#allocation11 + $0x1a0] sm:$0xff]
        %v1862 = vld [vmem:[#allocation11 + $0x1a8] sm:$0xff]
        %v1863 = vld [vmem:[#allocation11 + $0x1b0] sm:$0xff]
        %v1864 = vld [vmem:[#allocation11 + $0x1b8] sm:$0xff]
        %v1865 = vld [vmem:[#allocation11 + $0x1c0] sm:$0xff]
        %v1866 = vld [vmem:[#allocation11 + $0x1c8] sm:$0xff]
        %v1867 = vld [vmem:[#allocation11 + $0x1d0] sm:$0xff]
        %v1868 = vld [vmem:[#allocation11 + $0x1d8] sm:$0xff]
        %v1869 = vld [vmem:[#allocation11 + $0x1e0] sm:$0xff]
        %v1870 = vld [vmem:[#allocation11 + $0x1e8] sm:$0xff]
        %v1871 = vld [vmem:[#allocation11 + $0x1f0] sm:$0xff]
        %v1872 = vld [vmem:[#allocation11 + $0x1f8] sm:$0xff]
        %v1873 = vld [vmem:[%s11] sm:$0xf]
        %v1875 = vlaneseq
        %v1876 = vshrl.u32 %v1875, 7
        %v1877 = vsub.s32 0, %v1876
        %v1878 = vrot.slane %v1873, %v1877
        %v1879 = vlaneseq
        %v1880 = vshrl.u32 %v1879, 7
        %v1881 = vsub.s32 1, %v1880
        %v1882 = vrot.slane %v1873, %v1881
        %v1883 = vlaneseq
        %v1884 = vshrl.u32 %v1883, 7
        %v1885 = vsub.s32 2, %v1884
        %v1886 = vrot.slane %v1873, %v1885
        %v1887 = vlaneseq
        %v1888 = vshrl.u32 %v1887, 7
        %v1889 = vsub.s32 3, %v1888
        %v1890 = vrot.slane %v1873, %v1889
        %1895 = vmatprep.subr.mxu0 %v1810
        %1896 = vmatpush1.msra.mxu0 %v1809
        %1897 = vmatprep.subr.mxu0 %v1814
        %1898 = vmatpush1.msra.mxu0 %v1813
        %1899 = vmatprep.subr.mxu0 %v1818
        %1900 = vmatpush1.msra.mxu0 %v1817
        %1901 = vmatprep.subr.mxu0 %v1822
        %1902 = vmatpush1.msra.mxu0 %v1821
        %1903 = vmatprep.subr.mxu0 %v1826
        %1904 = vmatpush1.msra.mxu0 %v1825
        %1905 = vmatprep.subr.mxu0 %v1830
        %1906 = vmatpush1.msra.mxu0 %v1829
        %1907 = vmatprep.subr.mxu0 %v1834
        %1908 = vmatpush1.msra.mxu0 %v1833
        %1909 = vmatprep.subr.mxu0 %v1838
        %1910 = vmatpush1.msra.mxu0 %v1837
        %1911 = vmatprep.subr.mxu0 %v1842
        %1912 = vmatpush1.msra.mxu0 %v1841
        %1913 = vmatprep.subr.mxu0 %v1846
        %1914 = vmatpush1.msra.mxu0 %v1845
        %1915 = vmatprep.subr.mxu0 %v1850
        %1916 = vmatpush1.msra.mxu0 %v1849
        %1917 = vmatprep.subr.mxu0 %v1854
        %1918 = vmatpush1.msra.mxu0 %v1853
        %1919 = vmatprep.subr.mxu0 %v1858
        %1920 = vmatpush1.msra.mxu0 %v1857
        %1921 = vmatprep.subr.mxu0 %v1862
        %1922 = vmatpush1.msra.mxu0 %v1861
        %1923 = vmatprep.subr.mxu0 %v1866
        %1924 = vmatpush1.msra.mxu0 %v1865
        %1925 = vmatprep.subr.mxu0 %v1870
        %1926 = vmatpush1.msra.mxu0 %v1869
        %1927 = vmatprep.subr.mxu0 0.0
        %1928 = vmatpush1.msra.mxu0 0.0
        %1929 = vmatprep.subr.mxu0 0.0
        %1930 = vmatpush1.msra.mxu0 0.0
        %1931 = vmatprep.subr.mxu0 0.0
        %1932 = vmatpush1.msra.mxu0 0.0
        %1933 = vmatprep.subr.mxu0 0.0
        %1934 = vmatpush1.msra.mxu0 0.0
        %1935 = vmatprep.subr.mxu0 0.0
        %1936 = vmatpush1.msra.mxu0 0.0
        %1937 = vmatprep.subr.mxu0 0.0
        %1938 = vmatpush1.msra.mxu0 0.0
        %1939 = vmatprep.subr.mxu0 0.0
        %1940 = vmatpush1.msra.mxu0 0.0
        %1941 = vmatprep.subr.mxu0 0.0
        %1942 = vmatpush1.msra.mxu0 0.0
        %1943 = vmatprep.subr.mxu0 0.0
        %1944 = vmatpush1.msra.mxu0 0.0
        %1945 = vmatprep.subr.mxu0 0.0
        %1946 = vmatpush1.msra.mxu0 0.0
        %1947 = vmatprep.subr.mxu0 0.0
        %1948 = vmatpush1.msra.mxu0 0.0
        %1949 = vmatprep.subr.mxu0 0.0
        %1950 = vmatpush1.msra.mxu0 0.0
        %1951 = vmatprep.subr.mxu0 0.0
        %1952 = vmatpush1.msra.mxu0 0.0
        %1953 = vmatprep.subr.mxu0 0.0
        %1954 = vmatpush1.msra.mxu0 0.0
        %1955 = vmatprep.subr.mxu0 0.0
        %1956 = vmatpush1.msra.mxu0 0.0
        %1957 = vmatprep.subr.mxu0 0.0
        %1958 = vmatpush1.msra.mxu0 0.0
        %1959 = vmatprep.mubr.f32.mxu0 0.0
        %1960 = vmatmul.mubr.f32.gmra.mrb[0].mxu0 %v1807
        %v1961 = vpop.f32.mrb[0].mxu0
        %v1962 = vadd.f32 %v1878, %v1961
        %v1963 = vpop.f32.mrb[0].mxu0
        %v1964 = vadd.f32 %v1882, %v1963
        %1965 = vmatprep.mubr.f32.mxu0 0.0
        %1966 = vmatmul.mubr.f32.gmra.mrb[0].mxu0 %v1808
        %v1967 = vpop.f32.mrb[0].mxu0
        %v1968 = vadd.f32 %v1878, %v1967
        %v1969 = vpop.f32.mrb[0].mxu0
        %v1970 = vadd.f32 %v1882, %v1969
        %1971 = vdwg.mxu0
        %1972 = vmatprep.subr.mxu0 %v1812
        %1973 = vmatpush1.msra.mxu0 %v1811
        %1974 = vmatprep.subr.mxu0 %v1816
        %1975 = vmatpush1.msra.mxu0 %v1815
        %1976 = vmatprep.subr.mxu0 %v1820
        %1977 = vmatpush1.msra.mxu0 %v1819
        %1978 = vmatprep.subr.mxu0 %v1824
        %1979 = vmatpush1.msra.mxu0 %v1823
        %1980 = vmatprep.subr.mxu0 %v1828
        %1981 = vmatpush1.msra.mxu0 %v1827
        %1982 = vmatprep.subr.mxu0 %v1832
        %1983 = vmatpush1.msra.mxu0 %v1831
        %1984 = vmatprep.subr.mxu0 %v1836
        %1985 = vmatpush1.msra.mxu0 %v1835
        %1986 = vmatprep.subr.mxu0 %v1840
        %1987 = vmatpush1.msra.mxu0 %v1839
        %1988 = vmatprep.subr.mxu0 %v1844
        %1989 = vmatpush1.msra.mxu0 %v1843
        %1990 = vmatprep.subr.mxu0 %v1848
        %1991 = vmatpush1.msra.mxu0 %v1847
        %1992 = vmatprep.subr.mxu0 %v1852
        %1993 = vmatpush1.msra.mxu0 %v1851
        %1994 = vmatprep.subr.mxu0 %v1856
        %1995 = vmatpush1.msra.mxu0 %v1855
        %1996 = vmatprep.subr.mxu0 %v1860
        %1997 = vmatpush1.msra.mxu0 %v1859
        %1998 = vmatprep.subr.mxu0 %v1864
        %1999 = vmatpush1.msra.mxu0 %v1863
        %2000 = vmatprep.subr.mxu0 %v1868
        %2001 = vmatpush1.msra.mxu0 %v1867
        %2002 = vmatprep.subr.mxu0 %v1872
        %2003 = vmatpush1.msra.mxu0 %v1871
        %2004 = vmatprep.subr.mxu0 0.0
        %2005 = vmatpush1.msra.mxu0 0.0
        %2006 = vmatprep.subr.mxu0 0.0
        %2007 = vmatpush1.msra.mxu0 0.0
        %2008 = vmatprep.subr.mxu0 0.0
        %2009 = vmatpush1.msra.mxu0 0.0
        %2010 = vmatprep.subr.mxu0 0.0
        %2011 = vmatpush1.msra.mxu0 0.0
        %2012 = vmatprep.subr.mxu0 0.0
        %2013 = vmatpush1.msra.mxu0 0.0
        %2014 = vmatprep.subr.mxu0 0.0
        %2015 = vmatpush1.msra.mxu0 0.0
        %2016 = vmatprep.subr.mxu0 0.0
        %2017 = vmatpush1.msra.mxu0 0.0
        %2018 = vmatprep.subr.mxu0 0.0
        %2019 = vmatpush1.msra.mxu0 0.0
        %2020 = vmatprep.subr.mxu0 0.0
        %2021 = vmatpush1.msra.mxu0 0.0
        %2022 = vmatprep.subr.mxu0 0.0
        %2023 = vmatpush1.msra.mxu0 0.0
        %2024 = vmatprep.subr.mxu0 0.0
        %2025 = vmatpush1.msra.mxu0 0.0
        %2026 = vmatprep.subr.mxu0 0.0
        %2027 = vmatpush1.msra.mxu0 0.0
        %2028 = vmatprep.subr.mxu0 0.0
        %2029 = vmatpush1.msra.mxu0 0.0
        %2030 = vmatprep.subr.mxu0 0.0
        %2031 = vmatpush1.msra.mxu0 0.0
        %2032 = vmatprep.subr.mxu0 0.0
        %2033 = vmatpush1.msra.mxu0 0.0
        %2034 = vmatprep.subr.mxu0 0.0
        %2035 = vmatpush1.msra.mxu0 0.0
        %2036 = vmatprep.mubr.f32.mxu0 0.0
        %2037 = vmatmul.mubr.f32.gmra.mrb[0].mxu0 %v1807
        %v2038 = vpop.f32.mrb[0].mxu0
        %v2039 = vadd.f32 %v1886, %v2038
        %v2040 = vpop.f32.mrb[0].mxu0
        %v2041 = vadd.f32 %v1890, %v2040
        %2042 = vmatprep.mubr.f32.mxu0 0.0
        %2043 = vmatmul.mubr.f32.gmra.mrb[0].mxu0 %v1808
        %v2044 = vpop.f32.mrb[0].mxu0
        %v2045 = vadd.f32 %v1886, %v2044
        %v2046 = vpop.f32.mrb[0].mxu0
        %v2047 = vadd.f32 %v1890, %v2046
        %2048 = vdwg.mxu0
        %v2049 = vmul.f32 %v1962, -1.702
        %v2050 = vmul.f32 %v1964, -1.702
        %v2051 = vmul.f32 %v2039, -1.702
        %v2052 = vmul.f32 %v2041, -1.702
        %v2053 = vmul.f32 %v1968, -1.702
        %v2054 = vmul.f32 %v1970, -1.702
        %v2055 = vmul.f32 %v2045, -1.702
        %v2056 = vmul.f32 %v2047, -1.702
        %v2057 = vmul.f32 %v2049, 1.442695
        %v2058 = vpow.pop %v2057
        %v2059 = vmul.f32 %v2050, 1.442695
        %v2060 = vpow.pop %v2059
        %v2061 = vmul.f32 %v2051, 1.442695
        %v2062 = vpow.pop %v2061
        %v2063 = vmul.f32 %v2052, 1.442695
        %v2064 = vpow.pop %v2063
        %v2065 = vmul.f32 %v2053, 1.442695
        %v2066 = vpow.pop %v2065
        %v2067 = vmul.f32 %v2054, 1.442695
        %v2068 = vpow.pop %v2067
        %v2069 = vmul.f32 %v2055, 1.442695
        %v2070 = vpow.pop %v2069
        %v2071 = vmul.f32 %v2056, 1.442695
        %v2072 = vpow.pop %v2071
        %v2073 = vadd.f32 %v2058, 1.0
        %v2074 = vadd.f32 %v2060, 1.0
        %v2075 = vadd.f32 %v2062, 1.0
        %v2076 = vadd.f32 %v2064, 1.0
        %v2077 = vadd.f32 %v2066, 1.0
        %v2078 = vadd.f32 %v2068, 1.0
        %v2079 = vadd.f32 %v2070, 1.0
        %v2080 = vadd.f32 %v2072, 1.0
        %v2081 = vrcp.pop %v2073
        %v2082 = vmul.f32 1.0, %v2081
        %v2083 = vrcp.pop %v2074
        %v2084 = vmul.f32 1.0, %v2083
        %v2085 = vrcp.pop %v2075
        %v2086 = vmul.f32 1.0, %v2085
        %v2087 = vrcp.pop %v2076
        %v2088 = vmul.f32 1.0, %v2087
        %v2089 = vrcp.pop %v2077
        %v2090 = vmul.f32 1.0, %v2089
        %v2091 = vrcp.pop %v2078
        %v2092 = vmul.f32 1.0, %v2091
        %v2093 = vrcp.pop %v2079
        %v2094 = vmul.f32 1.0, %v2093
        %v2095 = vrcp.pop %v2080
        %v2096 = vmul.f32 1.0, %v2095
        %v2097 = vmul.f32 %v1962, %v2082
        %v2098 = vmul.f32 %v1964, %v2084
        %v2099 = vmul.f32 %v2039, %v2086
        %v2100 = vmul.f32 %v2041, %v2088
        %v2101 = vmul.f32 %v1968, %v2090
        %v2102 = vmul.f32 %v1970, %v2092
        %v2103 = vmul.f32 %v2045, %v2094
        %v2104 = vmul.f32 %v2047, %v2096
        %v2105 = vld [vmem:[#allocation13] sm:$0xff]
        %v2106 = vld [vmem:[#allocation13 + $0x8] sm:$0xff]
        %v2107 = vld [vmem:[#allocation13 + $0x10] sm:$0xff]
        %v2108 = vld [vmem:[#allocation13 + $0x18] sm:$0xff]
        %v2109 = vld [vmem:[#allocation13 + $0x20] sm:$0xff]
        %v2110 = vld [vmem:[#allocation13 + $0x28] sm:$0xff]
        %v2111 = vld [vmem:[#allocation13 + $0x30] sm:$0xff]
        %v2112 = vld [vmem:[#allocation13 + $0x38] sm:$0xff]
        %v2113 = vld [vmem:[#allocation13 + $0x40] sm:$0xff]
        %v2114 = vld [vmem:[#allocation13 + $0x48] sm:$0xff]
        %v2115 = vld [vmem:[#allocation13 + $0x50] sm:$0xff]
        %v2116 = vld [vmem:[#allocation13 + $0x58] sm:$0xff]
        %v2117 = vld [vmem:[#allocation13 + $0x60] sm:$0xff]
        %v2118 = vld [vmem:[#allocation13 + $0x68] sm:$0xff]
        %v2119 = vld [vmem:[#allocation13 + $0x70] sm:$0xff]
        %v2120 = vld [vmem:[#allocation13 + $0x78] sm:$0xff]
        %v2121 = vld [vmem:[#allocation13 + $0x80] sm:$0xff]
        %v2122 = vld [vmem:[#allocation13 + $0x88] sm:$0xff]
        %v2123 = vld [vmem:[#allocation13 + $0x90] sm:$0xff]
        %v2124 = vld [vmem:[#allocation13 + $0x98] sm:$0xff]
        %v2125 = vld [vmem:[#allocation13 + $0xa0] sm:$0xff]
        %v2126 = vld [vmem:[#allocation13 + $0xa8] sm:$0xff]
        %v2127 = vld [vmem:[#allocation13 + $0xb0] sm:$0xff]
        %v2128 = vld [vmem:[#allocation13 + $0xb8] sm:$0xff]
        %v2129 = vld [vmem:[#allocation13 + $0xc0] sm:$0xff]
        %v2130 = vld [vmem:[#allocation13 + $0xc8] sm:$0xff]
        %v2131 = vld [vmem:[#allocation13 + $0xd0] sm:$0xff]
        %v2132 = vld [vmem:[#allocation13 + $0xd8] sm:$0xff]
        %v2133 = vld [vmem:[#allocation13 + $0xe0] sm:$0xff]
        %v2134 = vld [vmem:[#allocation13 + $0xe8] sm:$0xff]
        %v2135 = vld [vmem:[#allocation13 + $0xf0] sm:$0xff]
        %v2136 = vld [vmem:[#allocation13 + $0xf8] sm:$0xff]
        %v2137 = vld [vmem:[#allocation13 + $0x100] sm:$0xff]
        %v2138 = vld [vmem:[#allocation13 + $0x108] sm:$0xff]
        %v2139 = vld [vmem:[#allocation13 + $0x110] sm:$0xff]
        %v2140 = vld [vmem:[#allocation13 + $0x118] sm:$0xff]
        %v2141 = vld [vmem:[#allocation13 + $0x120] sm:$0xff]
        %v2142 = vld [vmem:[#allocation13 + $0x128] sm:$0xff]
        %v2143 = vld [vmem:[#allocation13 + $0x130] sm:$0xff]
        %v2144 = vld [vmem:[#allocation13 + $0x138] sm:$0xff]
        %v2145 = vld [vmem:[#allocation13 + $0x140] sm:$0xff]
        %v2146 = vld [vmem:[#allocation13 + $0x148] sm:$0xff]
        %v2147 = vld [vmem:[#allocation13 + $0x150] sm:$0xff]
        %v2148 = vld [vmem:[#allocation13 + $0x158] sm:$0xff]
        %v2149 = vld [vmem:[#allocation13 + $0x160] sm:$0xff]
        %v2150 = vld [vmem:[#allocation13 + $0x168] sm:$0xff]
        %v2151 = vld [vmem:[#allocation13 + $0x170] sm:$0xff]
        %v2152 = vld [vmem:[#allocation13 + $0x178] sm:$0xff]
        %v2153 = vld [vmem:[#allocation13 + $0x180] sm:$0xff]
        %v2154 = vld [vmem:[#allocation13 + $0x188] sm:$0xff]
        %v2155 = vld [vmem:[#allocation13 + $0x190] sm:$0xff]
        %v2156 = vld [vmem:[#allocation13 + $0x198] sm:$0xff]
        %v2157 = vld [vmem:[#allocation13 + $0x1a0] sm:$0xff]
        %v2158 = vld [vmem:[#allocation13 + $0x1a8] sm:$0xff]
        %v2159 = vld [vmem:[#allocation13 + $0x1b0] sm:$0xff]
        %v2160 = vld [vmem:[#allocation13 + $0x1b8] sm:$0xff]
        %v2161 = vld [vmem:[#allocation13 + $0x1c0] sm:$0xff]
        %v2162 = vld [vmem:[#allocation13 + $0x1c8] sm:$0xff]
        %v2163 = vld [vmem:[#allocation13 + $0x1d0] sm:$0xff]
        %v2164 = vld [vmem:[#allocation13 + $0x1d8] sm:$0xff]
        %v2165 = vld [vmem:[#allocation13 + $0x1e0] sm:$0xff]
        %v2166 = vld [vmem:[#allocation13 + $0x1e8] sm:$0xff]
        %v2167 = vld [vmem:[#allocation13 + $0x1f0] sm:$0xff]
        %v2168 = vld [vmem:[#allocation13 + $0x1f8] sm:$0xff]
        %v2169 = vld [vmem:[%s13] sm:$0x1]
        %v2171 = vlaneseq
        %v2172 = vshrl.u32 %v2171, 7
        %v2173 = vsub.s32 0, %v2172
        %v2174 = vrot.slane %v2169, %v2173
        %2176 = vmatprep.subr.mxu0 0.0
        %2177 = vmatpush1.msra.mxu0 %v2105
        %2178 = vmatprep.subr.mxu0 0.0
        %2179 = vmatpush1.msra.mxu0 %v2106
        %2180 = vmatprep.subr.mxu0 0.0
        %2181 = vmatpush1.msra.mxu0 %v2107
        %2182 = vmatprep.subr.mxu0 0.0
        %2183 = vmatpush1.msra.mxu0 %v2108
        %2184 = vmatprep.subr.mxu0 0.0
        %2185 = vmatpush1.msra.mxu0 %v2109
        %2186 = vmatprep.subr.mxu0 0.0
        %2187 = vmatpush1.msra.mxu0 %v2110
        %2188 = vmatprep.subr.mxu0 0.0
        %2189 = vmatpush1.msra.mxu0 %v2111
        %2190 = vmatprep.subr.mxu0 0.0
        %2191 = vmatpush1.msra.mxu0 %v2112
        %2192 = vmatprep.subr.mxu0 0.0
        %2193 = vmatpush1.msra.mxu0 %v2113
        %2194 = vmatprep.subr.mxu0 0.0
        %2195 = vmatpush1.msra.mxu0 %v2114
        %2196 = vmatprep.subr.mxu0 0.0
        %2197 = vmatpush1.msra.mxu0 %v2115
        %2198 = vmatprep.subr.mxu0 0.0
        %2199 = vmatpush1.msra.mxu0 %v2116
        %2200 = vmatprep.subr.mxu0 0.0
        %2201 = vmatpush1.msra.mxu0 %v2117
        %2202 = vmatprep.subr.mxu0 0.0
        %2203 = vmatpush1.msra.mxu0 %v2118
        %2204 = vmatprep.subr.mxu0 0.0
        %2205 = vmatpush1.msra.mxu0 %v2119
        %2206 = vmatprep.subr.mxu0 0.0
        %2207 = vmatpush1.msra.mxu0 %v2120
        %2208 = vmatprep.subr.mxu0 0.0
        %2209 = vmatpush1.msra.mxu0 %v2121
        %2210 = vmatprep.subr.mxu0 0.0
        %2211 = vmatpush1.msra.mxu0 %v2122
        %2212 = vmatprep.subr.mxu0 0.0
        %2213 = vmatpush1.msra.mxu0 %v2123
        %2214 = vmatprep.subr.mxu0 0.0
        %2215 = vmatpush1.msra.mxu0 %v2124
        %2216 = vmatprep.subr.mxu0 0.0
        %2217 = vmatpush1.msra.mxu0 %v2125
        %2218 = vmatprep.subr.mxu0 0.0
        %2219 = vmatpush1.msra.mxu0 %v2126
        %2220 = vmatprep.subr.mxu0 0.0
        %2221 = vmatpush1.msra.mxu0 %v2127
        %2222 = vmatprep.subr.mxu0 0.0
        %2223 = vmatpush1.msra.mxu0 %v2128
        %2224 = vmatprep.subr.mxu0 0.0
        %2225 = vmatpush1.msra.mxu0 %v2129
        %2226 = vmatprep.subr.mxu0 0.0
        %2227 = vmatpush1.msra.mxu0 %v2130
        %2228 = vmatprep.subr.mxu0 0.0
        %2229 = vmatpush1.msra.mxu0 %v2131
        %2230 = vmatprep.subr.mxu0 0.0
        %2231 = vmatpush1.msra.mxu0 %v2132
        %2232 = vmatprep.subr.mxu0 0.0
        %2233 = vmatpush1.msra.mxu0 %v2133
        %2234 = vmatprep.subr.mxu0 0.0
        %2235 = vmatpush1.msra.mxu0 %v2134
        %2236 = vmatprep.subr.mxu0 0.0
        %2237 = vmatpush1.msra.mxu0 %v2135
        %2238 = vmatprep.subr.mxu0 0.0
        %2239 = vmatpush1.msra.mxu0 %v2136
        %2240 = vmatprep.mubr.f32.mxu0 %v2098
        %2241 = vmatmul.mubr.f32.gmra.mrb[0].mxu0 %v2097
        %v2242 = vpop.f32.mrb[0].mxu0
        %v2243 = vadd.f32 %v2174, %v2242
        %v2244 = vpop.f32.mrb[0].mxu0
        %2245 = vmatprep.mubr.f32.mxu0 %v2102
        %2246 = vmatmul.mubr.f32.gmra.mrb[0].mxu0 %v2101
        %v2247 = vpop.f32.mrb[0].mxu0
        %v2248 = vadd.f32 %v2174, %v2247
        %v2249 = vpop.f32.mrb[0].mxu0
        %2250 = vdwg.mxu0
        %2251 = vmatprep.subr.mxu0 0.0
        %2252 = vmatpush1.msra.mxu0 %v2137
        %2253 = vmatprep.subr.mxu0 0.0
        %2254 = vmatpush1.msra.mxu0 %v2138
        %2255 = vmatprep.subr.mxu0 0.0
        %2256 = vmatpush1.msra.mxu0 %v2139
        %2257 = vmatprep.subr.mxu0 0.0
        %2258 = vmatpush1.msra.mxu0 %v2140
        %2259 = vmatprep.subr.mxu0 0.0
        %2260 = vmatpush1.msra.mxu0 %v2141
        %2261 = vmatprep.subr.mxu0 0.0
        %2262 = vmatpush1.msra.mxu0 %v2142
        %2263 = vmatprep.subr.mxu0 0.0
        %2264 = vmatpush1.msra.mxu0 %v2143
        %2265 = vmatprep.subr.mxu0 0.0
        %2266 = vmatpush1.msra.mxu0 %v2144
        %2267 = vmatprep.subr.mxu0 0.0
        %2268 = vmatpush1.msra.mxu0 %v2145
        %2269 = vmatprep.subr.mxu0 0.0
        %2270 = vmatpush1.msra.mxu0 %v2146
        %2271 = vmatprep.subr.mxu0 0.0
        %2272 = vmatpush1.msra.mxu0 %v2147
        %2273 = vmatprep.subr.mxu0 0.0
        %2274 = vmatpush1.msra.mxu0 %v2148
        %2275 = vmatprep.subr.mxu0 0.0
        %2276 = vmatpush1.msra.mxu0 %v2149
        %2277 = vmatprep.subr.mxu0 0.0
        %2278 = vmatpush1.msra.mxu0 %v2150
        %2279 = vmatprep.subr.mxu0 0.0
        %2280 = vmatpush1.msra.mxu0 %v2151
        %2281 = vmatprep.subr.mxu0 0.0
        %2282 = vmatpush1.msra.mxu0 %v2152
        %2283 = vmatprep.subr.mxu0 0.0
        %2284 = vmatpush1.msra.mxu0 %v2153
        %2285 = vmatprep.subr.mxu0 0.0
        %2286 = vmatpush1.msra.mxu0 %v2154
        %2287 = vmatprep.subr.mxu0 0.0
        %2288 = vmatpush1.msra.mxu0 %v2155
        %2289 = vmatprep.subr.mxu0 0.0
        %2290 = vmatpush1.msra.mxu0 %v2156
        %2291 = vmatprep.subr.mxu0 0.0
        %2292 = vmatpush1.msra.mxu0 %v2157
        %2293 = vmatprep.subr.mxu0 0.0
        %2294 = vmatpush1.msra.mxu0 %v2158
        %2295 = vmatprep.subr.mxu0 0.0
        %2296 = vmatpush1.msra.mxu0 %v2159
        %2297 = vmatprep.subr.mxu0 0.0
        %2298 = vmatpush1.msra.mxu0 %v2160
        %2299 = vmatprep.subr.mxu0 0.0
        %2300 = vmatpush1.msra.mxu0 %v2161
        %2301 = vmatprep.subr.mxu0 0.0
        %2302 = vmatpush1.msra.mxu0 %v2162
        %2303 = vmatprep.subr.mxu0 0.0
        %2304 = vmatpush1.msra.mxu0 %v2163
        %2305 = vmatprep.subr.mxu0 0.0
        %2306 = vmatpush1.msra.mxu0 %v2164
        %2307 = vmatprep.subr.mxu0 0.0
        %2308 = vmatpush1.msra.mxu0 %v2165
        %2309 = vmatprep.subr.mxu0 0.0
        %2310 = vmatpush1.msra.mxu0 %v2166
        %2311 = vmatprep.subr.mxu0 0.0
        %2312 = vmatpush1.msra.mxu0 %v2167
        %2313 = vmatprep.subr.mxu0 0.0
        %2314 = vmatpush1.msra.mxu0 %v2168
        %2315 = vmatprep.mubr.f32.mxu0 %v2100
        %2316 = vmatmul.mubr.f32.gmra.mrb[0].mxu0 %v2099
        %v2317 = vpop.f32.mrb[0].mxu0
        %v2318 = vadd.f32 %v2243, %v2317
        %v2319 = vpop.f32.mrb[0].mxu0
        %2320 = vmatprep.mubr.f32.mxu0 %v2104
        %2321 = vmatmul.mubr.f32.gmra.mrb[0].mxu0 %v2103
        %v2322 = vpop.f32.mrb[0].mxu0
        %v2323 = vadd.f32 %v2248, %v2322
        %v2324 = vpop.f32.mrb[0].mxu0
        %2325 = vdwg.mxu0
        %v2326 = vadd.f32 %v1767, %v2318
        %v2327 = vadd.f32 %v1768, %v2323
        %2328 = vst [vmem:[%s570] sm:$0xff] %v2326
        %2329 = vst [vmem:[%s570 + $0x8] sm:$0xff] %v2327
        %s2330 = sand.u32 %s341, 1
        %s2331 = scalar_lea.sflag [#allocation4], %s2330
        %s2332 = sand.u32 %s341, 1
        %s2333 = smul.addr %s2332, 16
        %s2334 = scalar_lea.vmem [#allocation14], %s2333
        // Predicated region
        $region105: #{tpu_custom_call.1} parent=75 // pred_check
          %p2335 = pneg %p351
        $region106: #{tpu_custom_call.1} parent=75 // pred_check_branch
          %2337 = sbr.rel (%p2335) target = $region108
        $region107: #{tpu_custom_call.1} parent=75 // pred_region
          %s2339 = ssub.s32 256, 256
          %2340 = vsyncadd %s2331, %s2339
          %s2341 = smul.addr %s34, 2
          %s2342 = smul.addr %s2341, 128
          %s2343 = scalar_lea.hbm %s14, %s2342
          %s2344 = sshll.u32 %s2334, 4
          %s2345 = int_to_ptr.vmem [resolvable:$true] %s2344
          %2350 = dma.vmem_to_hbm [thread:$0]  %s2345, 256, %s2343, %s2331, 128, 128, 8
        $region108: #{tpu_custom_call.1} parent=75 // pred_fallthru
          _
      $region76: #{tpu_custom_call.1} parent=5 // pred_fallthru
        _
      %p2351 = scmp.le.s32.totalorder 2, %s29
      // Predicated region
      $region109: #{tpu_custom_call.1} parent=5 // pred_check
        %p2352 = pneg %p2351
      $region110: #{tpu_custom_call.1} parent=5 // pred_check_branch
        %2354 = sbr.rel (%p2352) target = $region112
      $region111: #{tpu_custom_call.1} parent=5 // pred_region
        %s2355 = ssub.s32 %s29, 2
        // Predicated region
        $region113: #{tpu_custom_call.1} parent=111 // pred_check
          %p2356 = pneg %p357
        $region114: #{tpu_custom_call.1} parent=111 // pred_check_branch
          %2358 = sbr.rel (%p2356) target = $region116
        $region115: #{tpu_custom_call.1} parent=111 // pred_region
          %s2359 = sand.u32 %s342, 1
          %s2360 = scalar_lea.sflag [#allocation4], %s2359
          %s2361 = sand.u32 %s342, 1
          %s2362 = smul.addr %s2361, 16
          %s2363 = scalar_lea.vmem [#allocation14], %s2362
          %2364 = dma.done %s2360, 256
        $region116: #{tpu_custom_call.1} parent=111 // pred_fallthru
          _
      $region112: #{tpu_custom_call.1} parent=5 // pred_fallthru
        _
    $region6: #{tpu_custom_call.1} parent=1 // loop_footer
      %s33 = sadd.s32 1, %s29
    $region7: #{tpu_custom_call.1} parent=1 // loop_footer_branch
      %28 = sbr.rel target = $region3
    $region8: #{tpu_custom_call.1} parent=1 // loop_exit
      _
    %2365 = vsyncpa [#allocation3], 1
    %s2366 = scalar_lea.sflag [#allocation3], 1
    %2367 = vsyncpa %s2366, 1
    %2368 = vsyncpa [#allocation6], 1
    %2369 = vsyncpa [#allocation9], 1
    %2370 = vsyncpa [#allocation12], 1
    %2371 = vsyncpa [#allocation4], 1
    %s2372 = scalar_lea.sflag [#allocation4], 1
    %2373 = vsyncpa %s2372, 1

</llo_original>
